<compile_context>
chip_gen: v7x
topology: tpu7x:2x2x1
jax: 0.10.0
libtpu: 0.0.40
codegen_flags: <defaults>
</compile_context>

<pallas_src>
import jax
import jax.numpy as jnp
from jax.experimental import pallas as pl
from jax.experimental.pallas import tpu as pltpu

EPS = 1e-5


# ----------------------------- Pallas kernel ------------------------------

def _iaff_kernel(x_ref, r_ref, w1_ref, b1_ref, w2_ref, b2_ref, o_ref):
    """One grid step: a (Bt, C, HW) NCHW slab of the batch.

    w1_ref : (2, 2*Ci, C)  stage-{1,2} first-layer weights, rows = [local ; global]
    b1_ref : (2, 2*Ci, 1)  matching first-layer biases (f32)
    w2_ref : (2, C, 2*Ci)  stage-{1,2} second-layer weights, cols = [local | global]
    b2_ref : (2, C, 1)     local+global second-layer bias sum (f32)
    """
    bt = x_ref.shape[0]
    ci = w1_ref.shape[1] // 2
    mxu_dtype = w1_ref.dtype            # bf16 recommended on v5e/v6e/v7x

    # Load the packed weights once per grid step (constant block index -> the
    # pipeline does not re-DMA them on later steps).
    w1 = w1_ref[...]
    b1 = b1_ref[...]
    w2 = w2_ref[...]
    b2 = b2_ref[...]

    def gate(v, s):
        # v: (C, HW) f32.  One fused MXU pass computes BOTH the local branch
        # and the pre-pool global branch (pooling is linear and precedes the
        # ReLU, so it commutes with the first conv+BN).
        h = jnp.dot(w1[s], v.astype(mxu_dtype),
                    preferred_element_type=jnp.float32)            # (2Ci, HW)
        hl = jnp.maximum(h[:ci] + b1[s, :ci], 0.0)                 # local  (Ci, HW)
        hg = jnp.maximum(jnp.mean(h[ci:], axis=1, keepdims=True)
                         + b1[s, ci:], 0.0)                        # global (Ci, 1)
        # Second layer also rides a single MXU call: [lw2 | gw2] @ [hl ; hg*1].
        # K = 2*Ci << 128, so the extra rows are free on the MXU.
        hc = jnp.concatenate(
            [hl, jnp.broadcast_to(hg, hl.shape)], axis=0)          # (2Ci, HW)
        z = jnp.dot(w2[s], hc.astype(mxu_dtype),
                    preferred_element_type=jnp.float32) + b2[s]    # (C, HW)
        return jax.nn.sigmoid(z)                                   # f32 (EUP)

    for b in range(bt):                     # static unroll over the batch tile
        x = x_ref[b].astype(jnp.float32)    # (C, HW)
        r = r_ref[b].astype(jnp.float32)
        d = x - r                           # x*w + r*(1-w) == r + d*w
        wei = gate(x + r, 0)                # stage 1: local_att + global_att
        xi = r + d * wei
        wei2 = gate(xi, 1)                  # stage 2: local_att2 + global_att (reused)
        o_ref[b] = (r + d * wei2).astype(o_ref.dtype)


# ------------------------------- wrapper -----------------------------------

def _choose_batch_tile(n, c, hw, itemsize, target_bytes=1 << 20):
    """Largest divisor of n whose (bt, C, HW) slab is <= target_bytes, keeping
    >= 2 grid steps when possible (v7x has two TensorCores)."""
    divs = [d for d in range(1, n + 1) if n % d == 0]
    if n >= 2:
        divs = [d for d in divs if n // d >= 2] or [1]
    fit = [d for d in divs if d * c * hw * itemsize <= target_bytes] or [1]
    return max(fit)


def iaff_pallas(x, res, packed, *, batch_tile=None):
    """x, res: (N, C, H, W) NCHW; packed = pack_params(local_att, global_att, local_att2)."""
    n, c, h, w = x.shape
    hw = h * w
    w1, b1, w2, b2 = packed

    # Free (contiguous) reshape -- no HBM transpose passes.
    xf = x.reshape(n, c, hw)
    rf = res.reshape(n, c, hw)

    bt = batch_tile or _choose_batch_tile(n, c, hw, x.dtype.itemsize)
    assert n % bt == 0, "batch_tile must divide the batch size"

    io_spec = pl.BlockSpec((bt, c, hw), lambda i: (i, 0, 0))

    def full_spec(p):
        return pl.BlockSpec(p.shape, lambda i: (0,) * p.ndim)

    block_bytes = bt * c * hw * x.dtype.itemsize
    # 3 double-buffered I/O slabs + generous headroom for the f32 intermediates
    # and the packed weights; capped below v7x's 64 MiB physical VMEM.
    vmem_limit = int(min(max(18 * block_bytes + (4 << 20), 16 << 20), 64 << 20))

    out = pl.pallas_call(
        _iaff_kernel,
        out_shape=jax.ShapeDtypeStruct((n, c, hw), x.dtype),
        grid_spec=pltpu.PrefetchScalarGridSpec(
            num_scalar_prefetch=0,
            grid=(n // bt,),
            in_specs=[io_spec, io_spec, full_spec(w1), full_spec(b1),
                      full_spec(w2), full_spec(b2)],
            out_specs=io_spec,
        ),
        compiler_params=pltpu.CompilerParams(
            dimension_semantics=("parallel",),
            vmem_limit_bytes=vmem_limit),
    )(xf, rf, w1, b1, w2, b2)

    return out.reshape(n, c, h, w)


# ---------------- parameter construction (plain-JAX glue) ------------------

def fold_conv_bn(w, b, gamma, beta, mean, var):
    """Fold 1x1 conv (w: (out,in), b: (out,)) + eval-mode BN into (out,in)/(out,)."""
    s = gamma / jnp.sqrt(var + EPS)
    return w * s[:, None], (b - mean) * s + beta


def make_conv_bn(key, c_in, c_out):
    k = jax.random.split(key, 6)
    w = jax.random.normal(k[0], (c_out, c_in), jnp.float32) / jnp.sqrt(float(c_in))
    b = 0.1 * jax.random.normal(k[1], (c_out,), jnp.float32)
    gamma = 1.0 + 0.1 * jax.random.normal(k[2], (c_out,), jnp.float32)
    beta = 0.1 * jax.random.normal(k[3], (c_out,), jnp.float32)
    mean = 0.1 * jax.random.normal(k[4], (c_out,), jnp.float32)
    var = 1.0 + 0.5 * jax.random.uniform(k[5], (c_out,), jnp.float32)
    return fold_conv_bn(w, b, gamma, beta, mean, var)


def make_branch(key, c, ci):
    k1, k2 = jax.random.split(key)
    w1, b1 = make_conv_bn(k1, c, ci)   # conv(C -> Ci) + BN
    w2, b2 = make_conv_bn(k2, ci, c)   # conv(Ci -> C) + BN
    return w1, b1, w2, b2


def pack_params(local1, glob, local2, mxu_dtype=jnp.bfloat16):
    """Pack the three used branches into 4 contiguous arrays (fewer DMA pipelines).
    MXU operand arrays are cast to `mxu_dtype`; biases stay f32."""
    lw1, lb1, lw2, lb2 = local1
    gw1, gb1, gw2, gb2 = glob
    l2w1, l2b1, l2w2, l2b2 = local2
    w1 = jnp.stack([jnp.concatenate([lw1, gw1], axis=0),
                    jnp.concatenate([l2w1, gw1], axis=0)]).astype(mxu_dtype)
    b1 = jnp.stack([jnp.concatenate([lb1, gb1], axis=0),
                    jnp.concatenate([l2b1, gb1], axis=0)])[..., None].astype(jnp.float32)
    w2 = jnp.stack([jnp.concatenate([lw2, gw2], axis=1),
                    jnp.concatenate([l2w2, gw2], axis=1)]).astype(mxu_dtype)
    b2 = jnp.stack([lb2 + gb2, l2b2 + gb2])[..., None].astype(jnp.float32)
    return w1, b1, w2, b2


# ---------------- pure-JAX reference (same folded params) ------------------

def iaff_reference(x, res, local1, glob, local2, mxu_dtype=jnp.float32):
    def conv1x1(v, w, b):
        y = jnp.einsum('oc,nchw->nohw', w.astype(mxu_dtype), v.astype(mxu_dtype),
                       preferred_element_type=jnp.float32)
        return y + b[None, :, None, None]

    def branch(v, p):
        w1, b1, w2, b2 = p
        return conv1x1(jnp.maximum(conv1x1(v, w1, b1), 0.0), w2, b2)

    xa = x + res
    wei = jax.nn.sigmoid(branch(xa, local1)
                         + branch(jnp.mean(xa, axis=(2, 3), keepdims=True), glob))
    xi = x * wei + res * (1.0 - wei)
    wei2 = jax.nn.sigmoid(branch(xi, local2)
                          + branch(jnp.mean(xi, axis=(2, 3), keepdims=True), glob))
    return x * wei2 + res * (1.0 - wei2)


if __name__ == "__main__":
    channels, rr = 64, 4
    inter = channels // rr
    n, hgt, wid = 4, 16, 16        # HW = 256: lane-dense (multiple of 128)

    key = jax.random.PRNGKey(0)
    kx, kr, k1, k2, k3 = jax.random.split(key, 5)
    x = jax.random.normal(kx, (n, channels, hgt, wid), jnp.float32)
    residual = jax.random.normal(kr, (n, channels, hgt, wid), jnp.float32)

    local1 = make_branch(k1, channels, inter)   # local_att  (conv+BN folded)
    glob = make_branch(k2, channels, inter)     # global_att (conv+BN folded)
    local2 = make_branch(k3, channels, inter)   # local_att2 (conv+BN folded)
    # TODO(synk): global_att2 is defined in the PyTorch __init__ but never used
    # in forward (upstream quirk); it is intentionally not instantiated here.

    # f32 MXU path: tight check against the plain-JAX reference.
    out_f32 = iaff_pallas(x, residual, pack_params(local1, glob, local2, jnp.float32))
    jax.block_until_ready(out_f32)
    ref_f32 = iaff_reference(x, residual, local1, glob, local2, jnp.float32)
    assert jnp.allclose(out_f32, ref_f32, atol=1e-4, rtol=1e-4), "f32 mismatch"

    # bf16 MXU path (recommended on v5e/v6e/v7x): matmul operands in bf16,
    # accumulation / pooling / sigmoid / gate math stay f32.
    out_bf16 = iaff_pallas(x, residual, pack_params(local1, glob, local2, jnp.bfloat16))
    jax.block_until_ready(out_bf16)
    ref_bf16 = iaff_reference(x, residual, local1, glob, local2, jnp.bfloat16)
    assert jnp.allclose(out_bf16, ref_bf16, atol=2e-2, rtol=2e-2), "bf16 mismatch"

    print("KERNEL_OK")
</pallas_src>

<mosaic_0001>
module attributes {stable_mosaic.version = 11 : i64} {
  func.func @_iaff_kernel(%arg0: i32, %arg1: memref<2x64x256xf32, #tpu.memory_space<vmem>>, %arg2: memref<2x64x256xf32, #tpu.memory_space<vmem>>, %arg3: memref<2x32x64xf32, #tpu.memory_space<vmem>>, %arg4: memref<2x32x1xf32, #tpu.memory_space<vmem>>, %arg5: memref<2x64x32xf32, #tpu.memory_space<vmem>>, %arg6: memref<2x64x1xf32, #tpu.memory_space<vmem>>, %arg7: memref<2x64x256xf32, #tpu.memory_space<vmem>>) attributes {dimension_semantics = [#tpu.dimension_semantics<parallel>], iteration_bounds = array<i64: 2>, scalar_prefetch = 0 : i64, scratch_operands = 0 : i64, tpu.core_type = #tpu.core_type<tc>, window_params = [{transform_indices = @transform_0, window_bounds = array<i64: 2, 64, 256>}, {transform_indices = @transform_1, window_bounds = array<i64: 2, 64, 256>}, {pipeline_mode = #tpu.pipeline_mode<synchronous>, transform_indices = @transform_2, window_bounds = array<i64: 2, 32, 64>}, {pipeline_mode = #tpu.pipeline_mode<synchronous>, transform_indices = @transform_3, window_bounds = array<i64: 2, 32, 1>}, {pipeline_mode = #tpu.pipeline_mode<synchronous>, transform_indices = @transform_4, window_bounds = array<i64: 2, 64, 32>}, {pipeline_mode = #tpu.pipeline_mode<synchronous>, transform_indices = @transform_5, window_bounds = array<i64: 2, 64, 1>}, {transform_indices = @transform_6, window_bounds = array<i64: 2, 64, 256>}]} {
    %c0 = arith.constant 0 : index
    %c0_0 = arith.constant 0 : index
    %c0_1 = arith.constant 0 : index
    %0 = vector.load %arg3[%c0, %c0_0, %c0_1] : memref<2x32x64xf32, #tpu.memory_space<vmem>>, vector<2x32x64xf32>
    %c0_2 = arith.constant 0 : index
    %c0_3 = arith.constant 0 : index
    %c0_4 = arith.constant 0 : index
    %1 = vector.load %arg4[%c0_2, %c0_3, %c0_4] : memref<2x32x1xf32, #tpu.memory_space<vmem>>, vector<2x32x1xf32>
    %c0_5 = arith.constant 0 : index
    %c0_6 = arith.constant 0 : index
    %c0_7 = arith.constant 0 : index
    %2 = vector.load %arg5[%c0_5, %c0_6, %c0_7] : memref<2x64x32xf32, #tpu.memory_space<vmem>>, vector<2x64x32xf32>
    %c0_8 = arith.constant 0 : index
    %c0_9 = arith.constant 0 : index
    %c0_10 = arith.constant 0 : index
    %3 = vector.load %arg6[%c0_8, %c0_9, %c0_10] : memref<2x64x1xf32, #tpu.memory_space<vmem>>, vector<2x64x1xf32>
    %c0_11 = arith.constant 0 : index
    %c0_12 = arith.constant 0 : index
    %c0_13 = arith.constant 0 : index
    %4 = vector.load %arg1[%c0_11, %c0_12, %c0_13] : memref<2x64x256xf32, #tpu.memory_space<vmem>>, vector<1x64x256xf32>
    %5 = vector.shape_cast %4 : vector<1x64x256xf32> to vector<64x256xf32>
    %c0_14 = arith.constant 0 : index
    %c0_15 = arith.constant 0 : index
    %c0_16 = arith.constant 0 : index
    %6 = vector.load %arg2[%c0_14, %c0_15, %c0_16] : memref<2x64x256xf32, #tpu.memory_space<vmem>>, vector<1x64x256xf32>
    %7 = vector.shape_cast %6 : vector<1x64x256xf32> to vector<64x256xf32>
    %8 = arith.subf %5, %7 : vector<64x256xf32>
    %9 = arith.addf %5, %7 : vector<64x256xf32>
    %10 = vector.extract_strided_slice %0 {offsets = [0, 0, 0], sizes = [1, 32, 64], strides = [1, 1, 1]} : vector<2x32x64xf32> to vector<1x32x64xf32>
    %11 = vector.shape_cast %10 : vector<1x32x64xf32> to vector<32x64xf32>
    %cst = arith.constant dense<0.000000e+00> : vector<32x256xf32>
    %12 = tpu.matmul %11, %9, %cst {dimension_numbers = #tpu.dot_dimension_numbers<[1], [0], [0], [1], [0, 0, 1, 1], [], []>} : vector<32x64xf32>, vector<64x256xf32>, vector<32x256xf32> -> vector<32x256xf32>
    %13 = vector.extract_strided_slice %12 {offsets = [0, 0], sizes = [16, 256], strides = [1, 1]} : vector<32x256xf32> to vector<16x256xf32>
    %14 = vector.extract_strided_slice %1 {offsets = [0, 0, 0], sizes = [1, 16, 1], strides = [1, 1, 1]} : vector<2x32x1xf32> to vector<1x16x1xf32>
    %15 = vector.shape_cast %14 : vector<1x16x1xf32> to vector<16x1xf32>
    %16 = vector.broadcast %15 : vector<16x1xf32> to vector<16x256xf32>
    %17 = arith.addf %13, %16 : vector<16x256xf32>
    %cst_17 = arith.constant 0.000000e+00 : f32
    %18 = vector.broadcast %cst_17 : f32 to vector<16x256xf32>
    %19 = arith.maximumf %17, %18 : vector<16x256xf32>
    %20 = vector.extract_strided_slice %12 {offsets = [16, 0], sizes = [16, 256], strides = [1, 1]} : vector<32x256xf32> to vector<16x256xf32>
    %cst_18 = arith.constant dense<0.000000e+00> : vector<16xf32>
    %21 = vector.multi_reduction <add>, %20, %cst_18 [1] : vector<16x256xf32> to vector<16xf32>
    %22 = vector.shape_cast %21 : vector<16xf32> to vector<16x1xf32>
    %cst_19 = arith.constant 2.560000e+02 : f32
    %23 = vector.broadcast %cst_19 : f32 to vector<16x1xf32>
    %24 = arith.divf %22, %23 : vector<16x1xf32>
    %25 = vector.extract_strided_slice %1 {offsets = [0, 16, 0], sizes = [1, 16, 1], strides = [1, 1, 1]} : vector<2x32x1xf32> to vector<1x16x1xf32>
    %26 = vector.shape_cast %25 : vector<1x16x1xf32> to vector<16x1xf32>
    %27 = arith.addf %24, %26 : vector<16x1xf32>
    %cst_20 = arith.constant 0.000000e+00 : f32
    %28 = vector.broadcast %cst_20 : f32 to vector<16x1xf32>
    %29 = arith.maximumf %27, %28 : vector<16x1xf32>
    %30 = vector.shape_cast %29 : vector<16x1xf32> to vector<16x1xf32>
    %31 = vector.broadcast %30 : vector<16x1xf32> to vector<16x256xf32>
    %32 = tpu.concatenate %19, %31 in 0 : vector<16x256xf32>, vector<16x256xf32> -> vector<32x256xf32>
    %33 = vector.extract_strided_slice %2 {offsets = [0, 0, 0], sizes = [1, 64, 32], strides = [1, 1, 1]} : vector<2x64x32xf32> to vector<1x64x32xf32>
    %34 = vector.shape_cast %33 : vector<1x64x32xf32> to vector<64x32xf32>
    %cst_21 = arith.constant dense<0.000000e+00> : vector<64x256xf32>
    %35 = tpu.matmul %34, %32, %cst_21 {dimension_numbers = #tpu.dot_dimension_numbers<[1], [0], [0], [1], [0, 0, 1, 1], [], []>} : vector<64x32xf32>, vector<32x256xf32>, vector<64x256xf32> -> vector<64x256xf32>
    %36 = vector.extract_strided_slice %3 {offsets = [0, 0, 0], sizes = [1, 64, 1], strides = [1, 1, 1]} : vector<2x64x1xf32> to vector<1x64x1xf32>
    %37 = vector.shape_cast %36 : vector<1x64x1xf32> to vector<64x1xf32>
    %38 = vector.broadcast %37 : vector<64x1xf32> to vector<64x256xf32>
    %39 = arith.addf %35, %38 : vector<64x256xf32>
    %40 = arith.negf %39 : vector<64x256xf32>
    %41 = math.exp %40 : vector<64x256xf32>
    %cst_22 = arith.constant 1.000000e+00 : f32
    %42 = vector.broadcast %cst_22 : f32 to vector<64x256xf32>
    %43 = arith.addf %42, %41 : vector<64x256xf32>
    %44 = arith.divf %42, %43 : vector<64x256xf32>
    %45 = arith.mulf %8, %44 : vector<64x256xf32>
    %46 = arith.addf %7, %45 : vector<64x256xf32>
    %47 = vector.extract_strided_slice %0 {offsets = [1, 0, 0], sizes = [1, 32, 64], strides = [1, 1, 1]} : vector<2x32x64xf32> to vector<1x32x64xf32>
    %48 = vector.shape_cast %47 : vector<1x32x64xf32> to vector<32x64xf32>
    %cst_23 = arith.constant dense<0.000000e+00> : vector<32x256xf32>
    %49 = tpu.matmul %48, %46, %cst_23 {dimension_numbers = #tpu.dot_dimension_numbers<[1], [0], [0], [1], [0, 0, 1, 1], [], []>} : vector<32x64xf32>, vector<64x256xf32>, vector<32x256xf32> -> vector<32x256xf32>
    %50 = vector.extract_strided_slice %49 {offsets = [0, 0], sizes = [16, 256], strides = [1, 1]} : vector<32x256xf32> to vector<16x256xf32>
    %51 = vector.extract_strided_slice %1 {offsets = [1, 0, 0], sizes = [1, 16, 1], strides = [1, 1, 1]} : vector<2x32x1xf32> to vector<1x16x1xf32>
    %52 = vector.shape_cast %51 : vector<1x16x1xf32> to vector<16x1xf32>
    %53 = vector.broadcast %52 : vector<16x1xf32> to vector<16x256xf32>
    %54 = arith.addf %50, %53 : vector<16x256xf32>
    %cst_24 = arith.constant 0.000000e+00 : f32
    %55 = vector.broadcast %cst_24 : f32 to vector<16x256xf32>
    %56 = arith.maximumf %54, %55 : vector<16x256xf32>
    %57 = vector.extract_strided_slice %49 {offsets = [16, 0], sizes = [16, 256], strides = [1, 1]} : vector<32x256xf32> to vector<16x256xf32>
    %cst_25 = arith.constant dense<0.000000e+00> : vector<16xf32>
    %58 = vector.multi_reduction <add>, %57, %cst_25 [1] : vector<16x256xf32> to vector<16xf32>
    %59 = vector.shape_cast %58 : vector<16xf32> to vector<16x1xf32>
    %cst_26 = arith.constant 2.560000e+02 : f32
    %60 = vector.broadcast %cst_26 : f32 to vector<16x1xf32>
    %61 = arith.divf %59, %60 : vector<16x1xf32>
    %62 = vector.extract_strided_slice %1 {offsets = [1, 16, 0], sizes = [1, 16, 1], strides = [1, 1, 1]} : vector<2x32x1xf32> to vector<1x16x1xf32>
    %63 = vector.shape_cast %62 : vector<1x16x1xf32> to vector<16x1xf32>
    %64 = arith.addf %61, %63 : vector<16x1xf32>
    %cst_27 = arith.constant 0.000000e+00 : f32
    %65 = vector.broadcast %cst_27 : f32 to vector<16x1xf32>
    %66 = arith.maximumf %64, %65 : vector<16x1xf32>
    %67 = vector.shape_cast %66 : vector<16x1xf32> to vector<16x1xf32>
    %68 = vector.broadcast %67 : vector<16x1xf32> to vector<16x256xf32>
    %69 = tpu.concatenate %56, %68 in 0 : vector<16x256xf32>, vector<16x256xf32> -> vector<32x256xf32>
    %70 = vector.extract_strided_slice %2 {offsets = [1, 0, 0], sizes = [1, 64, 32], strides = [1, 1, 1]} : vector<2x64x32xf32> to vector<1x64x32xf32>
    %71 = vector.shape_cast %70 : vector<1x64x32xf32> to vector<64x32xf32>
    %cst_28 = arith.constant dense<0.000000e+00> : vector<64x256xf32>
    %72 = tpu.matmul %71, %69, %cst_28 {dimension_numbers = #tpu.dot_dimension_numbers<[1], [0], [0], [1], [0, 0, 1, 1], [], []>} : vector<64x32xf32>, vector<32x256xf32>, vector<64x256xf32> -> vector<64x256xf32>
    %73 = vector.extract_strided_slice %3 {offsets = [1, 0, 0], sizes = [1, 64, 1], strides = [1, 1, 1]} : vector<2x64x1xf32> to vector<1x64x1xf32>
    %74 = vector.shape_cast %73 : vector<1x64x1xf32> to vector<64x1xf32>
    %75 = vector.broadcast %74 : vector<64x1xf32> to vector<64x256xf32>
    %76 = arith.addf %72, %75 : vector<64x256xf32>
    %77 = arith.negf %76 : vector<64x256xf32>
    %78 = math.exp %77 : vector<64x256xf32>
    %cst_29 = arith.constant 1.000000e+00 : f32
    %79 = vector.broadcast %cst_29 : f32 to vector<64x256xf32>
    %80 = arith.addf %79, %78 : vector<64x256xf32>
    %81 = arith.divf %79, %80 : vector<64x256xf32>
    %82 = arith.mulf %8, %81 : vector<64x256xf32>
    %83 = arith.addf %7, %82 : vector<64x256xf32>
    %c0_30 = arith.constant 0 : index
    %c0_31 = arith.constant 0 : index
    %c0_32 = arith.constant 0 : index
    %84 = vector.load %arg7[%c0_30, %c0_31, %c0_32] : memref<2x64x256xf32, #tpu.memory_space<vmem>>, vector<1x64x256xf32>
    %85 = vector.shape_cast %84 : vector<1x64x256xf32> to vector<64x256xf32>
    %86 = vector.shape_cast %83 : vector<64x256xf32> to vector<1x64x256xf32>
    tpu.vector_store %arg7[%c0_30, %c0_31, %c0_32], %86 {strides = array<i32>} : memref<2x64x256xf32, #tpu.memory_space<vmem>>, vector<1x64x256xf32>,
    %c1 = arith.constant 1 : index
    %c0_33 = arith.constant 0 : index
    %c0_34 = arith.constant 0 : index
    %87 = vector.load %arg1[%c1, %c0_33, %c0_34] : memref<2x64x256xf32, #tpu.memory_space<vmem>>, vector<1x64x256xf32>
    %88 = vector.shape_cast %87 : vector<1x64x256xf32> to vector<64x256xf32>
    %c1_35 = arith.constant 1 : index
    %c0_36 = arith.constant 0 : index
    %c0_37 = arith.constant 0 : index
    %89 = vector.load %arg2[%c1_35, %c0_36, %c0_37] : memref<2x64x256xf32, #tpu.memory_space<vmem>>, vector<1x64x256xf32>
    %90 = vector.shape_cast %89 : vector<1x64x256xf32> to vector<64x256xf32>
    %91 = arith.subf %88, %90 : vector<64x256xf32>
    %92 = arith.addf %88, %90 : vector<64x256xf32>
    %93 = vector.extract_strided_slice %0 {offsets = [0, 0, 0], sizes = [1, 32, 64], strides = [1, 1, 1]} : vector<2x32x64xf32> to vector<1x32x64xf32>
    %94 = vector.shape_cast %93 : vector<1x32x64xf32> to vector<32x64xf32>
    %cst_38 = arith.constant dense<0.000000e+00> : vector<32x256xf32>
    %95 = tpu.matmul %94, %92, %cst_38 {dimension_numbers = #tpu.dot_dimension_numbers<[1], [0], [0], [1], [0, 0, 1, 1], [], []>} : vector<32x64xf32>, vector<64x256xf32>, vector<32x256xf32> -> vector<32x256xf32>
    %96 = vector.extract_strided_slice %95 {offsets = [0, 0], sizes = [16, 256], strides = [1, 1]} : vector<32x256xf32> to vector<16x256xf32>
    %97 = vector.extract_strided_slice %1 {offsets = [0, 0, 0], sizes = [1, 16, 1], strides = [1, 1, 1]} : vector<2x32x1xf32> to vector<1x16x1xf32>
    %98 = vector.shape_cast %97 : vector<1x16x1xf32> to vector<16x1xf32>
    %99 = vector.broadcast %98 : vector<16x1xf32> to vector<16x256xf32>
    %100 = arith.addf %96, %99 : vector<16x256xf32>
    %cst_39 = arith.constant 0.000000e+00 : f32
    %101 = vector.broadcast %cst_39 : f32 to vector<16x256xf32>
    %102 = arith.maximumf %100, %101 : vector<16x256xf32>
    %103 = vector.extract_strided_slice %95 {offsets = [16, 0], sizes = [16, 256], strides = [1, 1]} : vector<32x256xf32> to vector<16x256xf32>
    %cst_40 = arith.constant dense<0.000000e+00> : vector<16xf32>
    %104 = vector.multi_reduction <add>, %103, %cst_40 [1] : vector<16x256xf32> to vector<16xf32>
    %105 = vector.shape_cast %104 : vector<16xf32> to vector<16x1xf32>
    %cst_41 = arith.constant 2.560000e+02 : f32
    %106 = vector.broadcast %cst_41 : f32 to vector<16x1xf32>
    %107 = arith.divf %105, %106 : vector<16x1xf32>
    %108 = vector.extract_strided_slice %1 {offsets = [0, 16, 0], sizes = [1, 16, 1], strides = [1, 1, 1]} : vector<2x32x1xf32> to vector<1x16x1xf32>
    %109 = vector.shape_cast %108 : vector<1x16x1xf32> to vector<16x1xf32>
    %110 = arith.addf %107, %109 : vector<16x1xf32>
    %cst_42 = arith.constant 0.000000e+00 : f32
    %111 = vector.broadcast %cst_42 : f32 to vector<16x1xf32>
    %112 = arith.maximumf %110, %111 : vector<16x1xf32>
    %113 = vector.shape_cast %112 : vector<16x1xf32> to vector<16x1xf32>
    %114 = vector.broadcast %113 : vector<16x1xf32> to vector<16x256xf32>
    %115 = tpu.concatenate %102, %114 in 0 : vector<16x256xf32>, vector<16x256xf32> -> vector<32x256xf32>
    %116 = vector.extract_strided_slice %2 {offsets = [0, 0, 0], sizes = [1, 64, 32], strides = [1, 1, 1]} : vector<2x64x32xf32> to vector<1x64x32xf32>
    %117 = vector.shape_cast %116 : vector<1x64x32xf32> to vector<64x32xf32>
    %cst_43 = arith.constant dense<0.000000e+00> : vector<64x256xf32>
    %118 = tpu.matmul %117, %115, %cst_43 {dimension_numbers = #tpu.dot_dimension_numbers<[1], [0], [0], [1], [0, 0, 1, 1], [], []>} : vector<64x32xf32>, vector<32x256xf32>, vector<64x256xf32> -> vector<64x256xf32>
    %119 = vector.extract_strided_slice %3 {offsets = [0, 0, 0], sizes = [1, 64, 1], strides = [1, 1, 1]} : vector<2x64x1xf32> to vector<1x64x1xf32>
    %120 = vector.shape_cast %119 : vector<1x64x1xf32> to vector<64x1xf32>
    %121 = vector.broadcast %120 : vector<64x1xf32> to vector<64x256xf32>
    %122 = arith.addf %118, %121 : vector<64x256xf32>
    %123 = arith.negf %122 : vector<64x256xf32>
    %124 = math.exp %123 : vector<64x256xf32>
    %cst_44 = arith.constant 1.000000e+00 : f32
    %125 = vector.broadcast %cst_44 : f32 to vector<64x256xf32>
    %126 = arith.addf %125, %124 : vector<64x256xf32>
    %127 = arith.divf %125, %126 : vector<64x256xf32>
    %128 = arith.mulf %91, %127 : vector<64x256xf32>
    %129 = arith.addf %90, %128 : vector<64x256xf32>
    %130 = vector.extract_strided_slice %0 {offsets = [1, 0, 0], sizes = [1, 32, 64], strides = [1, 1, 1]} : vector<2x32x64xf32> to vector<1x32x64xf32>
    %131 = vector.shape_cast %130 : vector<1x32x64xf32> to vector<32x64xf32>
    %cst_45 = arith.constant dense<0.000000e+00> : vector<32x256xf32>
    %132 = tpu.matmul %131, %129, %cst_45 {dimension_numbers = #tpu.dot_dimension_numbers<[1], [0], [0], [1], [0, 0, 1, 1], [], []>} : vector<32x64xf32>, vector<64x256xf32>, vector<32x256xf32> -> vector<32x256xf32>
    %133 = vector.extract_strided_slice %132 {offsets = [0, 0], sizes = [16, 256], strides = [1, 1]} : vector<32x256xf32> to vector<16x256xf32>
    %134 = vector.extract_strided_slice %1 {offsets = [1, 0, 0], sizes = [1, 16, 1], strides = [1, 1, 1]} : vector<2x32x1xf32> to vector<1x16x1xf32>
    %135 = vector.shape_cast %134 : vector<1x16x1xf32> to vector<16x1xf32>
    %136 = vector.broadcast %135 : vector<16x1xf32> to vector<16x256xf32>
    %137 = arith.addf %133, %136 : vector<16x256xf32>
    %cst_46 = arith.constant 0.000000e+00 : f32
    %138 = vector.broadcast %cst_46 : f32 to vector<16x256xf32>
    %139 = arith.maximumf %137, %138 : vector<16x256xf32>
    %140 = vector.extract_strided_slice %132 {offsets = [16, 0], sizes = [16, 256], strides = [1, 1]} : vector<32x256xf32> to vector<16x256xf32>
    %cst_47 = arith.constant dense<0.000000e+00> : vector<16xf32>
    %141 = vector.multi_reduction <add>, %140, %cst_47 [1] : vector<16x256xf32> to vector<16xf32>
    %142 = vector.shape_cast %141 : vector<16xf32> to vector<16x1xf32>
    %cst_48 = arith.constant 2.560000e+02 : f32
    %143 = vector.broadcast %cst_48 : f32 to vector<16x1xf32>
    %144 = arith.divf %142, %143 : vector<16x1xf32>
    %145 = vector.extract_strided_slice %1 {offsets = [1, 16, 0], sizes = [1, 16, 1], strides = [1, 1, 1]} : vector<2x32x1xf32> to vector<1x16x1xf32>
    %146 = vector.shape_cast %145 : vector<1x16x1xf32> to vector<16x1xf32>
    %147 = arith.addf %144, %146 : vector<16x1xf32>
    %cst_49 = arith.constant 0.000000e+00 : f32
    %148 = vector.broadcast %cst_49 : f32 to vector<16x1xf32>
    %149 = arith.maximumf %147, %148 : vector<16x1xf32>
    %150 = vector.shape_cast %149 : vector<16x1xf32> to vector<16x1xf32>
    %151 = vector.broadcast %150 : vector<16x1xf32> to vector<16x256xf32>
    %152 = tpu.concatenate %139, %151 in 0 : vector<16x256xf32>, vector<16x256xf32> -> vector<32x256xf32>
    %153 = vector.extract_strided_slice %2 {offsets = [1, 0, 0], sizes = [1, 64, 32], strides = [1, 1, 1]} : vector<2x64x32xf32> to vector<1x64x32xf32>
    %154 = vector.shape_cast %153 : vector<1x64x32xf32> to vector<64x32xf32>
    %cst_50 = arith.constant dense<0.000000e+00> : vector<64x256xf32>
    %155 = tpu.matmul %154, %152, %cst_50 {dimension_numbers = #tpu.dot_dimension_numbers<[1], [0], [0], [1], [0, 0, 1, 1], [], []>} : vector<64x32xf32>, vector<32x256xf32>, vector<64x256xf32> -> vector<64x256xf32>
    %156 = vector.extract_strided_slice %3 {offsets = [1, 0, 0], sizes = [1, 64, 1], strides = [1, 1, 1]} : vector<2x64x1xf32> to vector<1x64x1xf32>
    %157 = vector.shape_cast %156 : vector<1x64x1xf32> to vector<64x1xf32>
    %158 = vector.broadcast %157 : vector<64x1xf32> to vector<64x256xf32>
    %159 = arith.addf %155, %158 : vector<64x256xf32>
    %160 = arith.negf %159 : vector<64x256xf32>
    %161 = math.exp %160 : vector<64x256xf32>
    %cst_51 = arith.constant 1.000000e+00 : f32
    %162 = vector.broadcast %cst_51 : f32 to vector<64x256xf32>
    %163 = arith.addf %162, %161 : vector<64x256xf32>
    %164 = arith.divf %162, %163 : vector<64x256xf32>
    %165 = arith.mulf %91, %164 : vector<64x256xf32>
    %166 = arith.addf %90, %165 : vector<64x256xf32>
    %c1_52 = arith.constant 1 : index
    %c0_53 = arith.constant 0 : index
    %c0_54 = arith.constant 0 : index
    %167 = vector.load %arg7[%c1_52, %c0_53, %c0_54] : memref<2x64x256xf32, #tpu.memory_space<vmem>>, vector<1x64x256xf32>
    %168 = vector.shape_cast %167 : vector<1x64x256xf32> to vector<64x256xf32>
    %169 = vector.shape_cast %166 : vector<64x256xf32> to vector<1x64x256xf32>
    tpu.vector_store %arg7[%c1_52, %c0_53, %c0_54], %169 {strides = array<i32>} : memref<2x64x256xf32, #tpu.memory_space<vmem>>, vector<1x64x256xf32>,
    return
  }
  func.func @transform_0(%arg0: i32) -> (i32, i32, i32) {
    %c0_i32 = arith.constant 0 : i32
    %c0_i32_0 = arith.constant 0 : i32
    %c0_i32_1 = arith.constant 0 : i32
    return %arg0, %c0_i32, %c0_i32_0 : i32, i32, i32
  }
  func.func @transform_1(%arg0: i32) -> (i32, i32, i32) {
    %c0_i32 = arith.constant 0 : i32
    %c0_i32_0 = arith.constant 0 : i32
    %c0_i32_1 = arith.constant 0 : i32
    return %arg0, %c0_i32, %c0_i32_0 : i32, i32, i32
  }
  func.func @transform_2(%arg0: i32) -> (i32, i32, i32) {
    %c0_i32 = arith.constant 0 : i32
    %c0_i32_0 = arith.constant 0 : i32
    %c0_i32_1 = arith.constant 0 : i32
    %c0_i32_2 = arith.constant 0 : i32
    return %c0_i32, %c0_i32_0, %c0_i32_1 : i32, i32, i32
  }
  func.func @transform_3(%arg0: i32) -> (i32, i32, i32) {
    %c0_i32 = arith.constant 0 : i32
    %c0_i32_0 = arith.constant 0 : i32
    %c0_i32_1 = arith.constant 0 : i32
    %c0_i32_2 = arith.constant 0 : i32
    return %c0_i32, %c0_i32_0, %c0_i32_1 : i32, i32, i32
  }
  func.func @transform_4(%arg0: i32) -> (i32, i32, i32) {
    %c0_i32 = arith.constant 0 : i32
    %c0_i32_0 = arith.constant 0 : i32
    %c0_i32_1 = arith.constant 0 : i32
    %c0_i32_2 = arith.constant 0 : i32
    return %c0_i32, %c0_i32_0, %c0_i32_1 : i32, i32, i32
  }
  func.func @transform_5(%arg0: i32) -> (i32, i32, i32) {
    %c0_i32 = arith.constant 0 : i32
    %c0_i32_0 = arith.constant 0 : i32
    %c0_i32_1 = arith.constant 0 : i32
    %c0_i32_2 = arith.constant 0 : i32
    return %c0_i32, %c0_i32_0, %c0_i32_1 : i32, i32, i32
  }
  func.func @transform_6(%arg0: i32) -> (i32, i32, i32) {
    %c0_i32 = arith.constant 0 : i32
    %c0_i32_0 = arith.constant 0 : i32
    %c0_i32_1 = arith.constant 0 : i32
    return %arg0, %c0_i32, %c0_i32_0 : i32, i32, i32
  }
}

</mosaic_0001>

<llo_original>
// kernel: tpu_custom_call.1
$region0: #{tpu_custom_call.1}
  #allocation0 [shape = 'u32[]', space=smem, size = 0x4, offset = 0x4, fixed_abs, tag = 'smem constant byte address 0x4 - core index']
  #allocation1 [shape = 'u32[144,128]{1,0:T(1,128)}', space=vmem, size = 0x12000, scoped, tag = 'internal scratch']
  %s0 = inlined_call_operand.hbm [shape: f32[4,64,256], index: 0, kind: input, shape index: {}]
  %s1 = inlined_call_operand.hbm [shape: f32[4,64,256], index: 1, kind: input, shape index: {}]
  %s2 = inlined_call_operand.vmem [shape: f32[2,32,64], index: 2, kind: input, shape index: {}]
  %s3 = inlined_call_operand.vmem [shape: f32[2,32,1], index: 3, kind: input, shape index: {}]
  %s4 = inlined_call_operand.vmem [shape: f32[2,64,32], index: 4, kind: input, shape index: {}]
  %s5 = inlined_call_operand.vmem [shape: f32[2,64,1], index: 5, kind: input, shape index: {}]
  %s6 = inlined_call_operand.hbm [shape: f32[4,64,256], index: 6, kind: output, shape index: {}]
  %s7 = sld [smem:[#allocation0]]
  $region65: #{tpu_custom_call.1} parent=0
    _
  %s9 = ssub.s32 1, %s7
  %s10 = scalar_select 0, %s9, %s7
  $region1: #{tpu_custom_call.1} parent=0
    #allocation2 [shape = 'u8[262144]{0}', space=vmem, size = 0x40000, scoped, tag = 'input window, operand 0']
    #allocation3 [shape = 's32[2]{0}', space=sflag, size = 0x8, scoped, tag = 'scoped memory for tpu_custom_call.1']
    #allocation4 [shape = 's32[2]{0}', space=sflag, size = 0x8, scoped, tag = 'scoped memory for tpu_custom_call.1']
    #allocation5 [shape = 'u8[262144]{0}', space=vmem, size = 0x40000, scoped, tag = 'input window, operand 1']
    #allocation6 [shape = 's32[2]{0}', space=sflag, size = 0x8, scoped, tag = 'scoped memory for tpu_custom_call.1']
    #allocation7 [shape = 'u8[262144]{0}', space=vmem, size = 0x40000, scoped, tag = 'output window, operand 0']
    %11 = vsyncpa [#allocation3], 0
    %s12 = scalar_lea.sflag [#allocation3], 1
    %13 = vsyncpa %s12, 0
    %14 = vsyncpa [#allocation6], 0
    %s15 = scalar_lea.sflag [#allocation6], 1
    %16 = vsyncpa %s15, 0
    %17 = vsyncpa [#allocation4], 0
    %s18 = scalar_lea.sflag [#allocation4], 1
    %19 = vsyncpa %s18, 0
    loop: start=0, step=1, limit=4
    $region2: #{tpu_custom_call.1} parent=1 // loop_pre_header
      _
    $region3: #{tpu_custom_call.1} parent=1 // loop_header
      %s21 = sphi 0, %s25
      %p22 = scmp.ge.s32.totalorder %s21, 4
      %s31 = sphi 0, %s33
      %s34 = sphi 0, %s31
      %s35 = sphi 0, %s34
      %s51 = sphi 0, %s35
      %s57 = sphi 0, %s59
      %s60 = sphi 0, %s57
      %s61 = sphi 0, %s60
      %s77 = sphi 0, %s61
      %s81 = sphi 0, %s81
      %s83 = sphi 0, %s81
      %s84 = sphi 0, %s83
      %s98 = sphi 0, %s84
      %s102 = sphi 0, %s102
      %s104 = sphi 0, %s102
      %s105 = sphi 0, %s104
      %s119 = sphi 0, %s105
      %s123 = sphi 0, %s123
      %s125 = sphi 0, %s123
      %s126 = sphi 0, %s125
      %s140 = sphi 0, %s126
      %s144 = sphi 0, %s144
      %s146 = sphi 0, %s144
      %s147 = sphi 0, %s146
      %s161 = sphi 0, %s147
      %s167 = sphi 0, %s169
      %s170 = sphi 0, %s167
      %s171 = sphi 0, %s170
      %s187 = sphi 0, %s171
    $region4: #{tpu_custom_call.1} parent=1 // loop_header_branch
      %24 = sbr.rel (%p22) target = $region8
    $region5: #{tpu_custom_call.1} parent=1 // loop_body
      %s26 = ssub.s32 %s21, 1
      %s27 = ssub.s32 %s21, 2
      %s28 = sadd.s32 %s21, 1
      %s29 = ssub.s32 %s21, %s28
      %p30 = scmp.eq.s32.totalorder %s29, 0
      %s32 = sadd.s32 %s31, 1
      %s33 = scalar_select %p30, %s31, %s32
      %p36 = pneg %p30
      %p37 = scmp.eq.s32.totalorder %s21, 1
      %p38 = por %p36, %p37
      %p39 = scmp.ne.s32.totalorder %s31, %s34
      %p40 = scmp.eq.s32.totalorder %s21, 0
      %p41 = por %p39, %p40
      %p42 = scmp.ne.s32.totalorder %s31, %s34
      %p43 = scmp.eq.s32.totalorder %s26, 1
      %p44 = por %p42, %p43
      %p45 = scmp.ne.s32.totalorder %s34, %s35
      %p46 = scmp.eq.s32.totalorder %s26, 0
      %p47 = por %p45, %p46
      %p48 = scmp.ne.s32.totalorder %s34, %s35
      %p49 = scmp.eq.s32.totalorder %s27, 1
      %p50 = por %p48, %p49
      %p52 = scmp.ne.s32.totalorder %s35, %s51
      %p53 = scmp.eq.s32.totalorder %s27, 0
      %p54 = por %p52, %p53
      %s55 = ssub.s32 %s21, %s28
      %p56 = scmp.eq.s32.totalorder %s55, 0
      %s58 = sadd.s32 %s57, 1
      %s59 = scalar_select %p56, %s57, %s58
      %p62 = pneg %p56
      %p63 = scmp.eq.s32.totalorder %s21, 1
      %p64 = por %p62, %p63
      %p65 = scmp.ne.s32.totalorder %s57, %s60
      %p66 = scmp.eq.s32.totalorder %s21, 0
      %p67 = por %p65, %p66
      %p68 = scmp.ne.s32.totalorder %s57, %s60
      %p69 = scmp.eq.s32.totalorder %s26, 1
      %p70 = por %p68, %p69
      %p71 = scmp.ne.s32.totalorder %s60, %s61
      %p72 = scmp.eq.s32.totalorder %s26, 0
      %p73 = por %p71, %p72
      %p74 = scmp.ne.s32.totalorder %s60, %s61
      %p75 = scmp.eq.s32.totalorder %s27, 1
      %p76 = por %p74, %p75
      %p78 = scmp.ne.s32.totalorder %s61, %s77
      %p79 = scmp.eq.s32.totalorder %s27, 0
      %p80 = por %p78, %p79
      %s82 = sadd.s32 %s81, 1
      %p85 = scmp.eq.s32.totalorder %s21, 1
      %p86 = scmp.ne.s32.totalorder %s81, %s83
      %p87 = scmp.eq.s32.totalorder %s21, 0
      %p88 = por %p86, %p87
      %p89 = scmp.ne.s32.totalorder %s81, %s83
      %p90 = scmp.eq.s32.totalorder %s26, 1
      %p91 = por %p89, %p90
      %p92 = scmp.ne.s32.totalorder %s83, %s84
      %p93 = scmp.eq.s32.totalorder %s26, 0
      %p94 = por %p92, %p93
      %p95 = scmp.ne.s32.totalorder %s83, %s84
      %p96 = scmp.eq.s32.totalorder %s27, 1
      %p97 = por %p95, %p96
      %p99 = scmp.ne.s32.totalorder %s84, %s98
      %p100 = scmp.eq.s32.totalorder %s27, 0
      %p101 = por %p99, %p100
      %s103 = sadd.s32 %s102, 1
      %p106 = scmp.eq.s32.totalorder %s21, 1
      %p107 = scmp.ne.s32.totalorder %s102, %s104
      %p108 = scmp.eq.s32.totalorder %s21, 0
      %p109 = por %p107, %p108
      %p110 = scmp.ne.s32.totalorder %s102, %s104
      %p111 = scmp.eq.s32.totalorder %s26, 1
      %p112 = por %p110, %p111
      %p113 = scmp.ne.s32.totalorder %s104, %s105
      %p114 = scmp.eq.s32.totalorder %s26, 0
      %p115 = por %p113, %p114
      %p116 = scmp.ne.s32.totalorder %s104, %s105
      %p117 = scmp.eq.s32.totalorder %s27, 1
      %p118 = por %p116, %p117
      %p120 = scmp.ne.s32.totalorder %s105, %s119
      %p121 = scmp.eq.s32.totalorder %s27, 0
      %p122 = por %p120, %p121
      %s124 = sadd.s32 %s123, 1
      %p127 = scmp.eq.s32.totalorder %s21, 1
      %p128 = scmp.ne.s32.totalorder %s123, %s125
      %p129 = scmp.eq.s32.totalorder %s21, 0
      %p130 = por %p128, %p129
      %p131 = scmp.ne.s32.totalorder %s123, %s125
      %p132 = scmp.eq.s32.totalorder %s26, 1
      %p133 = por %p131, %p132
      %p134 = scmp.ne.s32.totalorder %s125, %s126
      %p135 = scmp.eq.s32.totalorder %s26, 0
      %p136 = por %p134, %p135
      %p137 = scmp.ne.s32.totalorder %s125, %s126
      %p138 = scmp.eq.s32.totalorder %s27, 1
      %p139 = por %p137, %p138
      %p141 = scmp.ne.s32.totalorder %s126, %s140
      %p142 = scmp.eq.s32.totalorder %s27, 0
      %p143 = por %p141, %p142
      %s145 = sadd.s32 %s144, 1
      %p148 = scmp.eq.s32.totalorder %s21, 1
      %p149 = scmp.ne.s32.totalorder %s144, %s146
      %p150 = scmp.eq.s32.totalorder %s21, 0
      %p151 = por %p149, %p150
      %p152 = scmp.ne.s32.totalorder %s144, %s146
      %p153 = scmp.eq.s32.totalorder %s26, 1
      %p154 = por %p152, %p153
      %p155 = scmp.ne.s32.totalorder %s146, %s147
      %p156 = scmp.eq.s32.totalorder %s26, 0
      %p157 = por %p155, %p156
      %p158 = scmp.ne.s32.totalorder %s146, %s147
      %p159 = scmp.eq.s32.totalorder %s27, 1
      %p160 = por %p158, %p159
      %p162 = scmp.ne.s32.totalorder %s147, %s161
      %p163 = scmp.eq.s32.totalorder %s27, 0
      %p164 = por %p162, %p163
      %s165 = ssub.s32 %s21, %s28
      %p166 = scmp.eq.s32.totalorder %s165, 0
      %s168 = sadd.s32 %s167, 1
      %s169 = scalar_select %p166, %s167, %s168
      %p172 = pneg %p166
      %p173 = scmp.eq.s32.totalorder %s21, 1
      %p174 = por %p172, %p173
      %p175 = scmp.ne.s32.totalorder %s167, %s170
      %p176 = scmp.eq.s32.totalorder %s21, 0
      %p177 = por %p175, %p176
      %p178 = scmp.ne.s32.totalorder %s167, %s170
      %p179 = scmp.eq.s32.totalorder %s26, 1
      %p180 = por %p178, %p179
      %p181 = scmp.ne.s32.totalorder %s170, %s171
      %p182 = scmp.eq.s32.totalorder %s26, 0
      %p183 = por %p181, %p182
      %p184 = scmp.ne.s32.totalorder %s170, %s171
      %p185 = scmp.eq.s32.totalorder %s27, 1
      %p186 = por %p184, %p185
      %p188 = scmp.ne.s32.totalorder %s171, %s187
      %p189 = scmp.eq.s32.totalorder %s27, 0
      %p190 = por %p188, %p189
      %p191 = scmp.le.s32.totalorder 1, %s21
      %p192 = scmp.lt.s32.totalorder %s21, 3
      %p193 = pnand %p191, %p192
      %p194 = pneg %p193
      // Predicated region
      $region9: #{tpu_custom_call.1} parent=5 // pred_check
        _
      $region10: #{tpu_custom_call.1} parent=5 // pred_check_branch
        %196 = sbr.rel (%p193) target = $region12
      $region11: #{tpu_custom_call.1} parent=5 // pred_region
        %s197 = ssub.s32 %s21, 1
        // Predicated region
        $region13: #{tpu_custom_call.1} parent=11 // pred_check
          %p198 = pneg %p94
        $region14: #{tpu_custom_call.1} parent=11 // pred_check_branch
          %200 = sbr.rel (%p198) target = $region16
        $region15: #{tpu_custom_call.1} parent=11 // pred_region
          _
        $region16: #{tpu_custom_call.1} parent=11 // pred_fallthru
          _
        // Predicated region
        $region17: #{tpu_custom_call.1} parent=11 // pred_check
          %p201 = pneg %p115
        $region18: #{tpu_custom_call.1} parent=11 // pred_check_branch
          %203 = sbr.rel (%p201) target = $region20
        $region19: #{tpu_custom_call.1} parent=11 // pred_region
          _
        $region20: #{tpu_custom_call.1} parent=11 // pred_fallthru
          _
        // Predicated region
        $region21: #{tpu_custom_call.1} parent=11 // pred_check
          %p204 = pneg %p136
        $region22: #{tpu_custom_call.1} parent=11 // pred_check_branch
          %206 = sbr.rel (%p204) target = $region24
        $region23: #{tpu_custom_call.1} parent=11 // pred_region
          _
        $region24: #{tpu_custom_call.1} parent=11 // pred_fallthru
          _
        // Predicated region
        $region25: #{tpu_custom_call.1} parent=11 // pred_check
          %p207 = pneg %p157
        $region26: #{tpu_custom_call.1} parent=11 // pred_check_branch
          %209 = sbr.rel (%p207) target = $region28
        $region27: #{tpu_custom_call.1} parent=11 // pred_region
          _
        $region28: #{tpu_custom_call.1} parent=11 // pred_fallthru
          _
      $region12: #{tpu_custom_call.1} parent=5 // pred_fallthru
        _
      %p210 = scmp.lt.s32.totalorder %s21, 2
      // Predicated region
      $region29: #{tpu_custom_call.1} parent=5 // pred_check
        %p211 = pneg %p210
      $region30: #{tpu_custom_call.1} parent=5 // pred_check_branch
        %213 = sbr.rel (%p211) target = $region32
      $region31: #{tpu_custom_call.1} parent=5 // pred_region
        // Predicated region
        $region33: #{tpu_custom_call.1} parent=31 // pred_check
          %p214 = pneg %p41
        $region34: #{tpu_custom_call.1} parent=31 // pred_check_branch
          %216 = sbr.rel (%p214) target = $region36
        $region35: #{tpu_custom_call.1} parent=31 // pred_region
          %s217 = sand.u32 %s31, 1
          %s218 = scalar_lea.sflag [#allocation3], %s217
          %s219 = sand.u32 %s31, 1
          %s220 = smul.addr %s219, 256
          %s221 = scalar_lea.vmem [#allocation2], %s220
          %s222 = smul.u32 2, %s21
          %s224 = ssub.s32 4096, 4096
          %225 = vsyncadd %s218, %s224
          %s226 = smul.addr %s222, 16
          %s227 = smul.addr %s226, 128
          %s228 = scalar_lea.hbm %s0, %s227
          %s229 = sshll.u32 %s221, 4
          %s230 = int_to_ptr.vmem [resolvable:$true] %s229
          %235 = dma.hbm_to_vmem [thread:$0]  %s228, 4096, %s230, %s218, 256, 256, 16
        $region36: #{tpu_custom_call.1} parent=31 // pred_fallthru
          _
        // Predicated region
        $region37: #{tpu_custom_call.1} parent=31 // pred_check
          %p236 = pneg %p67
        $region38: #{tpu_custom_call.1} parent=31 // pred_check_branch
          %238 = sbr.rel (%p236) target = $region40
        $region39: #{tpu_custom_call.1} parent=31 // pred_region
          %s239 = sand.u32 %s57, 1
          %s240 = scalar_lea.sflag [#allocation6], %s239
          %s241 = sand.u32 %s57, 1
          %s242 = smul.addr %s241, 256
          %s243 = scalar_lea.vmem [#allocation5], %s242
          %s244 = smul.u32 2, %s21
          %s246 = ssub.s32 4096, 4096
          %247 = vsyncadd %s240, %s246
          %s248 = smul.addr %s244, 16
          %s249 = smul.addr %s248, 128
          %s250 = scalar_lea.hbm %s1, %s249
          %s251 = sshll.u32 %s243, 4
          %s252 = int_to_ptr.vmem [resolvable:$true] %s251
          %257 = dma.hbm_to_vmem [thread:$0]  %s250, 4096, %s252, %s240, 256, 256, 16
        $region40: #{tpu_custom_call.1} parent=31 // pred_fallthru
          _
      $region32: #{tpu_custom_call.1} parent=5 // pred_fallthru
        _
      %p258 = scmp.le.s32.totalorder 1, %s21
      %p259 = scmp.lt.s32.totalorder %s21, 3
      %p260 = pnand %p258, %p259
      %p261 = pneg %p260
      // Predicated region
      $region41: #{tpu_custom_call.1} parent=5 // pred_check
        _
      $region42: #{tpu_custom_call.1} parent=5 // pred_check_branch
        %263 = sbr.rel (%p260) target = $region44
      $region43: #{tpu_custom_call.1} parent=5 // pred_region
        %s264 = ssub.s32 %s21, 1
        %s265 = sand.u32 %s34, 1
        %s266 = scalar_lea.sflag [#allocation3], %s265
        %s267 = sand.u32 %s34, 1
        %s268 = smul.addr %s267, 256
        %s269 = scalar_lea.vmem [#allocation2], %s268
        // Predicated region
        $region45: #{tpu_custom_call.1} parent=43 // pred_check
          %p270 = pneg %p47
        $region46: #{tpu_custom_call.1} parent=43 // pred_check_branch
          %272 = sbr.rel (%p270) target = $region48
        $region47: #{tpu_custom_call.1} parent=43 // pred_region
          %273 = dma.done %s266, 4096
        $region48: #{tpu_custom_call.1} parent=43 // pred_fallthru
          _
        %s274 = sand.u32 %s60, 1
        %s275 = scalar_lea.sflag [#allocation6], %s274
        %s276 = sand.u32 %s60, 1
        %s277 = smul.addr %s276, 256
        %s278 = scalar_lea.vmem [#allocation5], %s277
        // Predicated region
        $region49: #{tpu_custom_call.1} parent=43 // pred_check
          %p279 = pneg %p73
        $region50: #{tpu_custom_call.1} parent=43 // pred_check_branch
          %281 = sbr.rel (%p279) target = $region52
        $region51: #{tpu_custom_call.1} parent=43 // pred_region
          %282 = dma.done %s275, 4096
        $region52: #{tpu_custom_call.1} parent=43 // pred_fallthru
          _
        %s283 = sand.u32 %s34, 1
        %s284 = scalar_lea.sflag [#allocation3], %s283
        %s285 = sand.u32 %s34, 1
        %s286 = smul.addr %s285, 256
        %s287 = scalar_lea.vmem [#allocation2], %s286
        %p288 = pneg %p47
        %p289 = pneg %p44
        %s290 = sand.u32 %s60, 1
        %s291 = scalar_lea.sflag [#allocation6], %s290
        %s292 = sand.u32 %s60, 1
        %s293 = smul.addr %s292, 256
        %s294 = scalar_lea.vmem [#allocation5], %s293
        %p295 = pneg %p73
        %p296 = pneg %p70
        %p297 = pneg %p94
        %p298 = pneg %p91
        %p299 = pneg %p115
        %p300 = pneg %p112
        %p301 = pneg %p136
        %p302 = pneg %p133
        %p303 = pneg %p157
        %p304 = pneg %p154
        %p305 = pneg %p183
        %p306 = pneg %p180
        %s307 = sand.u32 %s170, 1
        %s308 = scalar_lea.sflag [#allocation4], %s307
        %s309 = sand.u32 %s170, 1
        %s310 = smul.addr %s309, 256
        %s311 = scalar_lea.vmem [#allocation7], %s310
        %s312 = smul.u32 2, %s26
        %s313 = smul.u32 2, %s26
        %s314 = smul.u32 2, %s26
        %v315 = vld [vmem:[%s2] sm:$0xff]
        %v316 = vld [vmem:[%s2 + $0x8] sm:$0xff]
        %v317 = vld [vmem:[%s2 + $0x10] sm:$0xff]
        %v318 = vld [vmem:[%s2 + $0x18] sm:$0xff]
        %v319 = vld [vmem:[%s2 + $0x20] sm:$0xff]
        %v320 = vld [vmem:[%s2 + $0x28] sm:$0xff]
        %v321 = vld [vmem:[%s2 + $0x30] sm:$0xff]
        %v322 = vld [vmem:[%s2 + $0x38] sm:$0xff]
        %v323 = vld [vmem:[%s3] sm:$0xff]
        %v324 = vld [vmem:[%s3 + $0x8] sm:$0xff]
        %v325 = vld [vmem:[%s3 + $0x10] sm:$0xff]
        %v326 = vld [vmem:[%s3 + $0x18] sm:$0xff]
        %v327 = vld [vmem:[%s3 + $0x20] sm:$0xff]
        %v328 = vld [vmem:[%s3 + $0x28] sm:$0xff]
        %v329 = vld [vmem:[%s3 + $0x30] sm:$0xff]
        %v330 = vld [vmem:[%s3 + $0x38] sm:$0xff]
        %v331 = vld [vmem:[%s4] sm:$0xff]
        %v332 = vld [vmem:[%s4 + $0x8] sm:$0xff]
        %v333 = vld [vmem:[%s4 + $0x10] sm:$0xff]
        %v334 = vld [vmem:[%s4 + $0x18] sm:$0xff]
        %v335 = vld [vmem:[%s4 + $0x20] sm:$0xff]
        %v336 = vld [vmem:[%s4 + $0x28] sm:$0xff]
        %v337 = vld [vmem:[%s4 + $0x30] sm:$0xff]
        %v338 = vld [vmem:[%s4 + $0x38] sm:$0xff]
        %v339 = vld [vmem:[%s4 + $0x40] sm:$0xff]
        %v340 = vld [vmem:[%s4 + $0x48] sm:$0xff]
        %v341 = vld [vmem:[%s4 + $0x50] sm:$0xff]
        %v342 = vld [vmem:[%s4 + $0x58] sm:$0xff]
        %v343 = vld [vmem:[%s4 + $0x60] sm:$0xff]
        %v344 = vld [vmem:[%s4 + $0x68] sm:$0xff]
        %v345 = vld [vmem:[%s4 + $0x70] sm:$0xff]
        %v346 = vld [vmem:[%s4 + $0x78] sm:$0xff]
        %v347 = vld [vmem:[%s5] sm:$0xff]
        %v348 = vld [vmem:[%s5 + $0x8] sm:$0xff]
        %v349 = vld [vmem:[%s5 + $0x10] sm:$0xff]
        %v350 = vld [vmem:[%s5 + $0x18] sm:$0xff]
        %v351 = vld [vmem:[%s5 + $0x20] sm:$0xff]
        %v352 = vld [vmem:[%s5 + $0x28] sm:$0xff]
        %v353 = vld [vmem:[%s5 + $0x30] sm:$0xff]
        %v354 = vld [vmem:[%s5 + $0x38] sm:$0xff]
        %v355 = vld [vmem:[%s5 + $0x40] sm:$0xff]
        %v356 = vld [vmem:[%s5 + $0x48] sm:$0xff]
        %v357 = vld [vmem:[%s5 + $0x50] sm:$0xff]
        %v358 = vld [vmem:[%s5 + $0x58] sm:$0xff]
        %v359 = vld [vmem:[%s5 + $0x60] sm:$0xff]
        %v360 = vld [vmem:[%s5 + $0x68] sm:$0xff]
        %v361 = vld [vmem:[%s5 + $0x70] sm:$0xff]
        %v362 = vld [vmem:[%s5 + $0x78] sm:$0xff]
        %v363 = vld [vmem:[%s269] sm:$0xff]
        %v364 = vld [vmem:[%s269 + $0x8] sm:$0xff]
        %v365 = vld [vmem:[%s269 + $0x10] sm:$0xff]
        %v366 = vld [vmem:[%s269 + $0x18] sm:$0xff]
        %v367 = vld [vmem:[%s269 + $0x20] sm:$0xff]
        %v368 = vld [vmem:[%s269 + $0x28] sm:$0xff]
        %v369 = vld [vmem:[%s269 + $0x30] sm:$0xff]
        %v370 = vld [vmem:[%s269 + $0x38] sm:$0xff]
        %v371 = vld [vmem:[%s269 + $0x40] sm:$0xff]
        %v372 = vld [vmem:[%s269 + $0x48] sm:$0xff]
        %v373 = vld [vmem:[%s269 + $0x50] sm:$0xff]
        %v374 = vld [vmem:[%s269 + $0x58] sm:$0xff]
        %v375 = vld [vmem:[%s269 + $0x60] sm:$0xff]
        %v376 = vld [vmem:[%s269 + $0x68] sm:$0xff]
        %v377 = vld [vmem:[%s269 + $0x70] sm:$0xff]
        %v378 = vld [vmem:[%s269 + $0x78] sm:$0xff]
        %v379 = vld [vmem:[%s278] sm:$0xff]
        %v380 = vld [vmem:[%s278 + $0x8] sm:$0xff]
        %v381 = vld [vmem:[%s278 + $0x10] sm:$0xff]
        %v382 = vld [vmem:[%s278 + $0x18] sm:$0xff]
        %v383 = vld [vmem:[%s278 + $0x20] sm:$0xff]
        %v384 = vld [vmem:[%s278 + $0x28] sm:$0xff]
        %v385 = vld [vmem:[%s278 + $0x30] sm:$0xff]
        %v386 = vld [vmem:[%s278 + $0x38] sm:$0xff]
        %v387 = vld [vmem:[%s278 + $0x40] sm:$0xff]
        %v388 = vld [vmem:[%s278 + $0x48] sm:$0xff]
        %v389 = vld [vmem:[%s278 + $0x50] sm:$0xff]
        %v390 = vld [vmem:[%s278 + $0x58] sm:$0xff]
        %v391 = vld [vmem:[%s278 + $0x60] sm:$0xff]
        %v392 = vld [vmem:[%s278 + $0x68] sm:$0xff]
        %v393 = vld [vmem:[%s278 + $0x70] sm:$0xff]
        %v394 = vld [vmem:[%s278 + $0x78] sm:$0xff]
        %v395 = vsub.f32 %v363, %v379
        %v396 = vsub.f32 %v364, %v380
        %v397 = vsub.f32 %v365, %v381
        %v398 = vsub.f32 %v366, %v382
        %v399 = vsub.f32 %v367, %v383
        %v400 = vsub.f32 %v368, %v384
        %v401 = vsub.f32 %v369, %v385
        %v402 = vsub.f32 %v370, %v386
        %v403 = vsub.f32 %v371, %v387
        %v404 = vsub.f32 %v372, %v388
        %v405 = vsub.f32 %v373, %v389
        %v406 = vsub.f32 %v374, %v390
        %v407 = vsub.f32 %v375, %v391
        %v408 = vsub.f32 %v376, %v392
        %v409 = vsub.f32 %v377, %v393
        %v410 = vsub.f32 %v378, %v394
        %v411 = vadd.f32 %v363, %v379
        %v412 = vadd.f32 %v364, %v380
        %v413 = vadd.f32 %v365, %v381
        %v414 = vadd.f32 %v366, %v382
        %v415 = vadd.f32 %v367, %v383
        %v416 = vadd.f32 %v368, %v384
        %v417 = vadd.f32 %v369, %v385
        %v418 = vadd.f32 %v370, %v386
        %v419 = vadd.f32 %v371, %v387
        %v420 = vadd.f32 %v372, %v388
        %v421 = vadd.f32 %v373, %v389
        %v422 = vadd.f32 %v374, %v390
        %v423 = vadd.f32 %v375, %v391
        %v424 = vadd.f32 %v376, %v392
        %v425 = vadd.f32 %v377, %v393
        %v426 = vadd.f32 %v378, %v394
        %vm427 = vcmask 523264
        %v429 = vsel %vm427, %v315, 0
        %v432 = vsel %vm427, %v316, 0
        %v435 = vsel %vm427, %v317, 0
        %v438 = vsel %vm427, %v318, 0
        %440 = vmatprep.subr.mxu0 %v412
        %441 = vmatpush1.msra.mxu0 %v411
        %442 = vmatprep.subr.mxu0 %v414
        %443 = vmatpush1.msra.mxu0 %v413
        %444 = vmatprep.subr.mxu0 %v416
        %445 = vmatpush1.msra.mxu0 %v415
        %446 = vmatprep.subr.mxu0 %v418
        %447 = vmatpush1.msra.mxu0 %v417
        %448 = vmatprep.subr.mxu0 %v420
        %449 = vmatpush1.msra.mxu0 %v419
        %450 = vmatprep.subr.mxu0 %v422
        %451 = vmatpush1.msra.mxu0 %v421
        %452 = vmatprep.subr.mxu0 %v424
        %453 = vmatpush1.msra.mxu0 %v423
        %454 = vmatprep.subr.mxu0 %v426
        %455 = vmatpush1.msra.mxu0 %v425
        %456 = vmatprep.subr.mxu0 0.0
        %457 = vmatpush1.msra.mxu0 0.0
        %458 = vmatprep.subr.mxu0 0.0
        %459 = vmatpush1.msra.mxu0 0.0
        %460 = vmatprep.subr.mxu0 0.0
        %461 = vmatpush1.msra.mxu0 0.0
        %462 = vmatprep.subr.mxu0 0.0
        %463 = vmatpush1.msra.mxu0 0.0
        %464 = vmatprep.subr.mxu0 0.0
        %465 = vmatpush1.msra.mxu0 0.0
        %466 = vmatprep.subr.mxu0 0.0
        %467 = vmatpush1.msra.mxu0 0.0
        %468 = vmatprep.subr.mxu0 0.0
        %469 = vmatpush1.msra.mxu0 0.0
        %470 = vmatprep.subr.mxu0 0.0
        %471 = vmatpush1.msra.mxu0 0.0
        %472 = vmatprep.subr.mxu0 0.0
        %473 = vmatpush1.msra.mxu0 0.0
        %474 = vmatprep.subr.mxu0 0.0
        %475 = vmatpush1.msra.mxu0 0.0
        %476 = vmatprep.subr.mxu0 0.0
        %477 = vmatpush1.msra.mxu0 0.0
        %478 = vmatprep.subr.mxu0 0.0
        %479 = vmatpush1.msra.mxu0 0.0
        %480 = vmatprep.subr.mxu0 0.0
        %481 = vmatpush1.msra.mxu0 0.0
        %482 = vmatprep.subr.mxu0 0.0
        %483 = vmatpush1.msra.mxu0 0.0
        %484 = vmatprep.subr.mxu0 0.0
        %485 = vmatpush1.msra.mxu0 0.0
        %486 = vmatprep.subr.mxu0 0.0
        %487 = vmatpush1.msra.mxu0 0.0
        %488 = vmatprep.subr.mxu0 0.0
        %489 = vmatpush1.msra.mxu0 0.0
        %490 = vmatprep.subr.mxu0 0.0
        %491 = vmatpush1.msra.mxu0 0.0
        %492 = vmatprep.subr.mxu0 0.0
        %493 = vmatpush1.msra.mxu0 0.0
        %494 = vmatprep.subr.mxu0 0.0
        %495 = vmatpush1.msra.mxu0 0.0
        %496 = vmatprep.subr.mxu0 0.0
        %497 = vmatpush1.msra.mxu0 0.0
        %498 = vmatprep.subr.mxu0 0.0
        %499 = vmatpush1.msra.mxu0 0.0
        %500 = vmatprep.subr.mxu0 0.0
        %501 = vmatpush1.msra.mxu0 0.0
        %502 = vmatprep.subr.mxu0 0.0
        %503 = vmatpush1.msra.mxu0 0.0
        %504 = vmatprep.mubr.f32.mxu0 0.0
        %505 = vmatmul.mubr.f32.gmra.mrb[0].mxu0 %v429
        %v506 = vpop.f32.mrb[0].mxu0
        %v507 = vadd.f32 0.0, %v506
        %v508 = vpop.f32.mrb[0].mxu0
        %v509 = vadd.f32 0.0, %v508
        %510 = vmatprep.mubr.f32.mxu0 0.0
        %511 = vmatmul.mubr.f32.gmra.mrb[0].mxu0 %v432
        %v512 = vpop.f32.mrb[0].mxu0
        %v513 = vadd.f32 0.0, %v512
        %v514 = vpop.f32.mrb[0].mxu0
        %v515 = vadd.f32 0.0, %v514
        %516 = vmatprep.mubr.f32.mxu0 0.0
        %517 = vmatmul.mubr.f32.gmra.mrb[0].mxu0 %v435
        %v518 = vpop.f32.mrb[0].mxu0
        %v519 = vadd.f32 0.0, %v518
        %v520 = vpop.f32.mrb[0].mxu0
        %v521 = vadd.f32 0.0, %v520
        %522 = vmatprep.mubr.f32.mxu0 0.0
        %523 = vmatmul.mubr.f32.gmra.mrb[0].mxu0 %v438
        %v524 = vpop.f32.mrb[0].mxu0
        %v525 = vadd.f32 0.0, %v524
        %v526 = vpop.f32.mrb[0].mxu0
        %v527 = vadd.f32 0.0, %v526
        %528 = vdwg.mxu0
        %530 = vset.pattern.permute.xlu0 0
        %531 = vperm.xlu0 %530, %v323
        %v532 = vpop.permute.xlu0 %531
        %535 = vset.pattern.permute.xlu0 0
        %536 = vperm.xlu0 %535, %v324
        %v537 = vpop.permute.xlu0 %536
        %v539 = vadd.f32 %v507, %v532
        %v540 = vadd.f32 %v509, %v532
        %v541 = vadd.f32 %v513, %v537
        %v542 = vadd.f32 %v515, %v537
        %v543 = vmax.f32 %v539, 0.0
        %v544 = vmax.f32 %v540, 0.0
        %v545 = vmax.f32 %v541, 0.0
        %v546 = vmax.f32 %v542, 0.0
        %v547 = vadd.f32 %v519, %v521
        %548 = vadd.xlane.f32.xlu0 %v547
        %v549 = vpop.xlane.xlu0 %548
        %v550 = vadd.f32 %v525, %v527
        %551 = vadd.xlane.f32.xlu0 %v550
        %v552 = vpop.xlane.xlu0 %551
        %v553 = vrcp.pop 256.0
        %v554 = vmul.f32 %v549, %v553
        %v555 = vmul.f32 %v552, %v553
        %v556 = vadd.f32 %v554, %v325
        %v557 = vadd.f32 %v555, %v326
        %v558 = vmax.f32 %v556, 0.0
        %v559 = vmax.f32 %v557, 0.0
        %561 = vset.pattern.permute.xlu0 0
        %562 = vperm.xlu0 %561, %v558
        %v563 = vpop.permute.xlu0 %562
        %566 = vset.pattern.permute.xlu0 0
        %567 = vperm.xlu0 %566, %v559
        %v568 = vpop.permute.xlu0 %567
        %571 = vset.pattern.permute.xlu0 0
        %572 = vperm.xlu0 %571, %v347
        %v573 = vpop.permute.xlu0 %572
        %576 = vset.pattern.permute.xlu0 0
        %577 = vperm.xlu0 %576, %v348
        %v578 = vpop.permute.xlu0 %577
        %581 = vset.pattern.permute.xlu0 0
        %582 = vperm.xlu0 %581, %v349
        %v583 = vpop.permute.xlu0 %582
        %586 = vset.pattern.permute.xlu0 0
        %587 = vperm.xlu0 %586, %v350
        %v588 = vpop.permute.xlu0 %587
        %591 = vset.pattern.permute.xlu0 0
        %592 = vperm.xlu0 %591, %v351
        %v593 = vpop.permute.xlu0 %592
        %596 = vset.pattern.permute.xlu0 0
        %597 = vperm.xlu0 %596, %v352
        %v598 = vpop.permute.xlu0 %597
        %601 = vset.pattern.permute.xlu0 0
        %602 = vperm.xlu0 %601, %v353
        %v603 = vpop.permute.xlu0 %602
        %606 = vset.pattern.permute.xlu0 0
        %607 = vperm.xlu0 %606, %v354
        %v608 = vpop.permute.xlu0 %607
        %vm610 = vcmask 261120
        %v612 = vsel %vm610, %v331, 0
        %v615 = vsel %vm610, %v332, 0
        %v618 = vsel %vm610, %v333, 0
        %v621 = vsel %vm610, %v334, 0
        %v624 = vsel %vm610, %v335, 0
        %v627 = vsel %vm610, %v336, 0
        %v630 = vsel %vm610, %v337, 0
        %v633 = vsel %vm610, %v338, 0
        %635 = vmatprep.subr.mxu0 %v544
        %636 = vmatpush1.msra.mxu0 %v543
        %637 = vmatprep.subr.mxu0 %v546
        %638 = vmatpush1.msra.mxu0 %v545
        %639 = vmatprep.subr.mxu0 %v563
        %640 = vmatpush1.msra.mxu0 %v563
        %641 = vmatprep.subr.mxu0 %v568
        %642 = vmatpush1.msra.mxu0 %v568
        %643 = vmatprep.subr.mxu0 0.0
        %644 = vmatpush1.msra.mxu0 0.0
        %645 = vmatprep.subr.mxu0 0.0
        %646 = vmatpush1.msra.mxu0 0.0
        %647 = vmatprep.subr.mxu0 0.0
        %648 = vmatpush1.msra.mxu0 0.0
        %649 = vmatprep.subr.mxu0 0.0
        %650 = vmatpush1.msra.mxu0 0.0
        %651 = vmatprep.subr.mxu0 0.0
        %652 = vmatpush1.msra.mxu0 0.0
        %653 = vmatprep.subr.mxu0 0.0
        %654 = vmatpush1.msra.mxu0 0.0
        %655 = vmatprep.subr.mxu0 0.0
        %656 = vmatpush1.msra.mxu0 0.0
        %657 = vmatprep.subr.mxu0 0.0
        %658 = vmatpush1.msra.mxu0 0.0
        %659 = vmatprep.subr.mxu0 0.0
        %660 = vmatpush1.msra.mxu0 0.0
        %661 = vmatprep.subr.mxu0 0.0
        %662 = vmatpush1.msra.mxu0 0.0
        %663 = vmatprep.subr.mxu0 0.0
        %664 = vmatpush1.msra.mxu0 0.0
        %665 = vmatprep.subr.mxu0 0.0
        %666 = vmatpush1.msra.mxu0 0.0
        %667 = vmatprep.subr.mxu0 0.0
        %668 = vmatpush1.msra.mxu0 0.0
        %669 = vmatprep.subr.mxu0 0.0
        %670 = vmatpush1.msra.mxu0 0.0
        %671 = vmatprep.subr.mxu0 0.0
        %672 = vmatpush1.msra.mxu0 0.0
        %673 = vmatprep.subr.mxu0 0.0
        %674 = vmatpush1.msra.mxu0 0.0
        %675 = vmatprep.subr.mxu0 0.0
        %676 = vmatpush1.msra.mxu0 0.0
        %677 = vmatprep.subr.mxu0 0.0
        %678 = vmatpush1.msra.mxu0 0.0
        %679 = vmatprep.subr.mxu0 0.0
        %680 = vmatpush1.msra.mxu0 0.0
        %681 = vmatprep.subr.mxu0 0.0
        %682 = vmatpush1.msra.mxu0 0.0
        %683 = vmatprep.subr.mxu0 0.0
        %684 = vmatpush1.msra.mxu0 0.0
        %685 = vmatprep.subr.mxu0 0.0
        %686 = vmatpush1.msra.mxu0 0.0
        %687 = vmatprep.subr.mxu0 0.0
        %688 = vmatpush1.msra.mxu0 0.0
        %689 = vmatprep.subr.mxu0 0.0
        %690 = vmatpush1.msra.mxu0 0.0
        %691 = vmatprep.subr.mxu0 0.0
        %692 = vmatpush1.msra.mxu0 0.0
        %693 = vmatprep.subr.mxu0 0.0
        %694 = vmatpush1.msra.mxu0 0.0
        %695 = vmatprep.subr.mxu0 0.0
        %696 = vmatpush1.msra.mxu0 0.0
        %697 = vmatprep.subr.mxu0 0.0
        %698 = vmatpush1.msra.mxu0 0.0
        %699 = vmatprep.mubr.f32.mxu0 0.0
        %700 = vmatmul.mubr.f32.gmra.mrb[0].mxu0 %v612
        %v701 = vpop.f32.mrb[0].mxu0
        %v702 = vadd.f32 %v573, %v701
        %v703 = vpop.f32.mrb[0].mxu0
        %v704 = vadd.f32 %v573, %v703
        %705 = vmatprep.mubr.f32.mxu0 0.0
        %706 = vmatmul.mubr.f32.gmra.mrb[0].mxu0 %v615
        %v707 = vpop.f32.mrb[0].mxu0
        %v708 = vadd.f32 %v578, %v707
        %v709 = vpop.f32.mrb[0].mxu0
        %v710 = vadd.f32 %v578, %v709
        %711 = vmatprep.mubr.f32.mxu0 0.0
        %712 = vmatmul.mubr.f32.gmra.mrb[0].mxu0 %v618
        %v713 = vpop.f32.mrb[0].mxu0
        %v714 = vadd.f32 %v583, %v713
        %v715 = vpop.f32.mrb[0].mxu0
        %v716 = vadd.f32 %v583, %v715
        %717 = vmatprep.mubr.f32.mxu0 0.0
        %718 = vmatmul.mubr.f32.gmra.mrb[0].mxu0 %v621
        %v719 = vpop.f32.mrb[0].mxu0
        %v720 = vadd.f32 %v588, %v719
        %v721 = vpop.f32.mrb[0].mxu0
        %v722 = vadd.f32 %v588, %v721
        %723 = vmatprep.mubr.f32.mxu0 0.0
        %724 = vmatmul.mubr.f32.gmra.mrb[0].mxu0 %v624
        %v725 = vpop.f32.mrb[0].mxu0
        %v726 = vadd.f32 %v593, %v725
        %v727 = vpop.f32.mrb[0].mxu0
        %v728 = vadd.f32 %v593, %v727
        %729 = vmatprep.mubr.f32.mxu0 0.0
        %730 = vmatmul.mubr.f32.gmra.mrb[0].mxu0 %v627
        %v731 = vpop.f32.mrb[0].mxu0
        %v732 = vadd.f32 %v598, %v731
        %v733 = vpop.f32.mrb[0].mxu0
        %v734 = vadd.f32 %v598, %v733
        %735 = vmatprep.mubr.f32.mxu0 0.0
        %736 = vmatmul.mubr.f32.gmra.mrb[0].mxu0 %v630
        %v737 = vpop.f32.mrb[0].mxu0
        %v738 = vadd.f32 %v603, %v737
        %v739 = vpop.f32.mrb[0].mxu0
        %v740 = vadd.f32 %v603, %v739
        %741 = vmatprep.mubr.f32.mxu0 0.0
        %742 = vmatmul.mubr.f32.gmra.mrb[0].mxu0 %v633
        %v743 = vpop.f32.mrb[0].mxu0
        %v744 = vadd.f32 %v608, %v743
        %v745 = vpop.f32.mrb[0].mxu0
        %v746 = vadd.f32 %v608, %v745
        %747 = vdwg.mxu0
        %v748 = vxor.u32 %v702, 2147483648
        %v749 = vxor.u32 %v704, 2147483648
        %v750 = vxor.u32 %v708, 2147483648
        %v751 = vxor.u32 %v710, 2147483648
        %v752 = vxor.u32 %v714, 2147483648
        %v753 = vxor.u32 %v716, 2147483648
        %v754 = vxor.u32 %v720, 2147483648
        %v755 = vxor.u32 %v722, 2147483648
        %v756 = vxor.u32 %v726, 2147483648
        %v757 = vxor.u32 %v728, 2147483648
        %v758 = vxor.u32 %v732, 2147483648
        %v759 = vxor.u32 %v734, 2147483648
        %v760 = vxor.u32 %v738, 2147483648
        %v761 = vxor.u32 %v740, 2147483648
        %v762 = vxor.u32 %v744, 2147483648
        %v763 = vxor.u32 %v746, 2147483648
        %v764 = vmul.f32 %v748, 1.442695
        %v765 = vpow.pop %v764
        %v766 = vmul.f32 %v749, 1.442695
        %v767 = vpow.pop %v766
        %v768 = vmul.f32 %v750, 1.442695
        %v769 = vpow.pop %v768
        %v770 = vmul.f32 %v751, 1.442695
        %v771 = vpow.pop %v770
        %v772 = vmul.f32 %v752, 1.442695
        %v773 = vpow.pop %v772
        %v774 = vmul.f32 %v753, 1.442695
        %v775 = vpow.pop %v774
        %v776 = vmul.f32 %v754, 1.442695
        %v777 = vpow.pop %v776
        %v778 = vmul.f32 %v755, 1.442695
        %v779 = vpow.pop %v778
        %v780 = vmul.f32 %v756, 1.442695
        %v781 = vpow.pop %v780
        %v782 = vmul.f32 %v757, 1.442695
        %v783 = vpow.pop %v782
        %v784 = vmul.f32 %v758, 1.442695
        %v785 = vpow.pop %v784
        %v786 = vmul.f32 %v759, 1.442695
        %v787 = vpow.pop %v786
        %v788 = vmul.f32 %v760, 1.442695
        %v789 = vpow.pop %v788
        %v790 = vmul.f32 %v761, 1.442695
        %v791 = vpow.pop %v790
        %v792 = vmul.f32 %v762, 1.442695
        %v793 = vpow.pop %v792
        %v794 = vmul.f32 %v763, 1.442695
        %v795 = vpow.pop %v794
        %v796 = vadd.f32 %v765, 1.0
        %v797 = vadd.f32 %v767, 1.0
        %v798 = vadd.f32 %v769, 1.0
        %v799 = vadd.f32 %v771, 1.0
        %v800 = vadd.f32 %v773, 1.0
        %v801 = vadd.f32 %v775, 1.0
        %v802 = vadd.f32 %v777, 1.0
        %v803 = vadd.f32 %v779, 1.0
        %v804 = vadd.f32 %v781, 1.0
        %v805 = vadd.f32 %v783, 1.0
        %v806 = vadd.f32 %v785, 1.0
        %v807 = vadd.f32 %v787, 1.0
        %v808 = vadd.f32 %v789, 1.0
        %v809 = vadd.f32 %v791, 1.0
        %v810 = vadd.f32 %v793, 1.0
        %v811 = vadd.f32 %v795, 1.0
        %v812 = vrcp.pop %v796
        %v813 = vmul.f32 1.0, %v812
        %v814 = vrcp.pop %v797
        %v815 = vmul.f32 1.0, %v814
        %v816 = vrcp.pop %v798
        %v817 = vmul.f32 1.0, %v816
        %v818 = vrcp.pop %v799
        %v819 = vmul.f32 1.0, %v818
        %v820 = vrcp.pop %v800
        %v821 = vmul.f32 1.0, %v820
        %v822 = vrcp.pop %v801
        %v823 = vmul.f32 1.0, %v822
        %v824 = vrcp.pop %v802
        %v825 = vmul.f32 1.0, %v824
        %v826 = vrcp.pop %v803
        %v827 = vmul.f32 1.0, %v826
        %v828 = vrcp.pop %v804
        %v829 = vmul.f32 1.0, %v828
        %v830 = vrcp.pop %v805
        %v831 = vmul.f32 1.0, %v830
        %v832 = vrcp.pop %v806
        %v833 = vmul.f32 1.0, %v832
        %v834 = vrcp.pop %v807
        %v835 = vmul.f32 1.0, %v834
        %v836 = vrcp.pop %v808
        %v837 = vmul.f32 1.0, %v836
        %v838 = vrcp.pop %v809
        %v839 = vmul.f32 1.0, %v838
        %v840 = vrcp.pop %v810
        %v841 = vmul.f32 1.0, %v840
        %v842 = vrcp.pop %v811
        %v843 = vmul.f32 1.0, %v842
        %v844 = vmul.f32 %v395, %v813
        %v845 = vmul.f32 %v396, %v815
        %v846 = vmul.f32 %v397, %v817
        %v847 = vmul.f32 %v398, %v819
        %v848 = vmul.f32 %v399, %v821
        %v849 = vmul.f32 %v400, %v823
        %v850 = vmul.f32 %v401, %v825
        %v851 = vmul.f32 %v402, %v827
        %v852 = vmul.f32 %v403, %v829
        %v853 = vmul.f32 %v404, %v831
        %v854 = vmul.f32 %v405, %v833
        %v855 = vmul.f32 %v406, %v835
        %v856 = vmul.f32 %v407, %v837
        %v857 = vmul.f32 %v408, %v839
        %v858 = vmul.f32 %v409, %v841
        %v859 = vmul.f32 %v410, %v843
        %v860 = vadd.f32 %v379, %v844
        %v861 = vadd.f32 %v380, %v845
        %v862 = vadd.f32 %v381, %v846
        %v863 = vadd.f32 %v382, %v847
        %v864 = vadd.f32 %v383, %v848
        %v865 = vadd.f32 %v384, %v849
        %v866 = vadd.f32 %v385, %v850
        %v867 = vadd.f32 %v386, %v851
        %v868 = vadd.f32 %v387, %v852
        %v869 = vadd.f32 %v388, %v853
        %v870 = vadd.f32 %v389, %v854
        %v871 = vadd.f32 %v390, %v855
        %v872 = vadd.f32 %v391, %v856
        %v873 = vadd.f32 %v392, %v857
        %v874 = vadd.f32 %v393, %v858
        %v875 = vadd.f32 %v394, %v859
        %v877 = vsel %vm427, %v319, 0
        %v880 = vsel %vm427, %v320, 0
        %v883 = vsel %vm427, %v321, 0
        %v886 = vsel %vm427, %v322, 0
        %888 = vmatprep.subr.mxu0 %v861
        %889 = vmatpush1.msra.mxu0 %v860
        %890 = vmatprep.subr.mxu0 %v863
        %891 = vmatpush1.msra.mxu0 %v862
        %892 = vmatprep.subr.mxu0 %v865
        %893 = vmatpush1.msra.mxu0 %v864
        %894 = vmatprep.subr.mxu0 %v867
        %895 = vmatpush1.msra.mxu0 %v866
        %896 = vmatprep.subr.mxu0 %v869
        %897 = vmatpush1.msra.mxu0 %v868
        %898 = vmatprep.subr.mxu0 %v871
        %899 = vmatpush1.msra.mxu0 %v870
        %900 = vmatprep.subr.mxu0 %v873
        %901 = vmatpush1.msra.mxu0 %v872
        %902 = vmatprep.subr.mxu0 %v875
        %903 = vmatpush1.msra.mxu0 %v874
        %904 = vmatprep.subr.mxu0 0.0
        %905 = vmatpush1.msra.mxu0 0.0
        %906 = vmatprep.subr.mxu0 0.0
        %907 = vmatpush1.msra.mxu0 0.0
        %908 = vmatprep.subr.mxu0 0.0
        %909 = vmatpush1.msra.mxu0 0.0
        %910 = vmatprep.subr.mxu0 0.0
        %911 = vmatpush1.msra.mxu0 0.0
        %912 = vmatprep.subr.mxu0 0.0
        %913 = vmatpush1.msra.mxu0 0.0
        %914 = vmatprep.subr.mxu0 0.0
        %915 = vmatpush1.msra.mxu0 0.0
        %916 = vmatprep.subr.mxu0 0.0
        %917 = vmatpush1.msra.mxu0 0.0
        %918 = vmatprep.subr.mxu0 0.0
        %919 = vmatpush1.msra.mxu0 0.0
        %920 = vmatprep.subr.mxu0 0.0
        %921 = vmatpush1.msra.mxu0 0.0
        %922 = vmatprep.subr.mxu0 0.0
        %923 = vmatpush1.msra.mxu0 0.0
        %924 = vmatprep.subr.mxu0 0.0
        %925 = vmatpush1.msra.mxu0 0.0
        %926 = vmatprep.subr.mxu0 0.0
        %927 = vmatpush1.msra.mxu0 0.0
        %928 = vmatprep.subr.mxu0 0.0
        %929 = vmatpush1.msra.mxu0 0.0
        %930 = vmatprep.subr.mxu0 0.0
        %931 = vmatpush1.msra.mxu0 0.0
        %932 = vmatprep.subr.mxu0 0.0
        %933 = vmatpush1.msra.mxu0 0.0
        %934 = vmatprep.subr.mxu0 0.0
        %935 = vmatpush1.msra.mxu0 0.0
        %936 = vmatprep.subr.mxu0 0.0
        %937 = vmatpush1.msra.mxu0 0.0
        %938 = vmatprep.subr.mxu0 0.0
        %939 = vmatpush1.msra.mxu0 0.0
        %940 = vmatprep.subr.mxu0 0.0
        %941 = vmatpush1.msra.mxu0 0.0
        %942 = vmatprep.subr.mxu0 0.0
        %943 = vmatpush1.msra.mxu0 0.0
        %944 = vmatprep.subr.mxu0 0.0
        %945 = vmatpush1.msra.mxu0 0.0
        %946 = vmatprep.subr.mxu0 0.0
        %947 = vmatpush1.msra.mxu0 0.0
        %948 = vmatprep.subr.mxu0 0.0
        %949 = vmatpush1.msra.mxu0 0.0
        %950 = vmatprep.subr.mxu0 0.0
        %951 = vmatpush1.msra.mxu0 0.0
        %952 = vmatprep.mubr.f32.mxu0 0.0
        %953 = vmatmul.mubr.f32.gmra.mrb[0].mxu0 %v877
        %v954 = vpop.f32.mrb[0].mxu0
        %v955 = vadd.f32 0.0, %v954
        %v956 = vpop.f32.mrb[0].mxu0
        %v957 = vadd.f32 0.0, %v956
        %958 = vmatprep.mubr.f32.mxu0 0.0
        %959 = vmatmul.mubr.f32.gmra.mrb[0].mxu0 %v880
        %v960 = vpop.f32.mrb[0].mxu0
        %v961 = vadd.f32 0.0, %v960
        %v962 = vpop.f32.mrb[0].mxu0
        %v963 = vadd.f32 0.0, %v962
        %964 = vmatprep.mubr.f32.mxu0 0.0
        %965 = vmatmul.mubr.f32.gmra.mrb[0].mxu0 %v883
        %v966 = vpop.f32.mrb[0].mxu0
        %v967 = vadd.f32 0.0, %v966
        %v968 = vpop.f32.mrb[0].mxu0
        %v969 = vadd.f32 0.0, %v968
        %970 = vmatprep.mubr.f32.mxu0 0.0
        %971 = vmatmul.mubr.f32.gmra.mrb[0].mxu0 %v886
        %v972 = vpop.f32.mrb[0].mxu0
        %v973 = vadd.f32 0.0, %v972
        %v974 = vpop.f32.mrb[0].mxu0
        %v975 = vadd.f32 0.0, %v974
        %976 = vdwg.mxu0
        %978 = vset.pattern.permute.xlu0 0
        %979 = vperm.xlu0 %978, %v327
        %v980 = vpop.permute.xlu0 %979
        %983 = vset.pattern.permute.xlu0 0
        %984 = vperm.xlu0 %983, %v328
        %v985 = vpop.permute.xlu0 %984
        %v987 = vadd.f32 %v955, %v980
        %v988 = vadd.f32 %v957, %v980
        %v989 = vadd.f32 %v961, %v985
        %v990 = vadd.f32 %v963, %v985
        %v991 = vmax.f32 %v987, 0.0
        %v992 = vmax.f32 %v988, 0.0
        %v993 = vmax.f32 %v989, 0.0
        %v994 = vmax.f32 %v990, 0.0
        %v995 = vadd.f32 %v967, %v969
        %996 = vadd.xlane.f32.xlu0 %v995
        %v997 = vpop.xlane.xlu0 %996
        %v998 = vadd.f32 %v973, %v975
        %999 = vadd.xlane.f32.xlu0 %v998
        %v1000 = vpop.xlane.xlu0 %999
        %v1001 = vmul.f32 %v997, %v553
        %v1002 = vmul.f32 %v1000, %v553
        %v1003 = vadd.f32 %v1001, %v329
        %v1004 = vadd.f32 %v1002, %v330
        %v1005 = vmax.f32 %v1003, 0.0
        %v1006 = vmax.f32 %v1004, 0.0
        %1008 = vset.pattern.permute.xlu0 0
        %1009 = vperm.xlu0 %1008, %v1005
        %v1010 = vpop.permute.xlu0 %1009
        %1013 = vset.pattern.permute.xlu0 0
        %1014 = vperm.xlu0 %1013, %v1006
        %v1015 = vpop.permute.xlu0 %1014
        %1018 = vset.pattern.permute.xlu0 0
        %1019 = vperm.xlu0 %1018, %v355
        %v1020 = vpop.permute.xlu0 %1019
        %1023 = vset.pattern.permute.xlu0 0
        %1024 = vperm.xlu0 %1023, %v356
        %v1025 = vpop.permute.xlu0 %1024
        %1028 = vset.pattern.permute.xlu0 0
        %1029 = vperm.xlu0 %1028, %v357
        %v1030 = vpop.permute.xlu0 %1029
        %1033 = vset.pattern.permute.xlu0 0
        %1034 = vperm.xlu0 %1033, %v358
        %v1035 = vpop.permute.xlu0 %1034
        %1038 = vset.pattern.permute.xlu0 0
        %1039 = vperm.xlu0 %1038, %v359
        %v1040 = vpop.permute.xlu0 %1039
        %1043 = vset.pattern.permute.xlu0 0
        %1044 = vperm.xlu0 %1043, %v360
        %v1045 = vpop.permute.xlu0 %1044
        %1048 = vset.pattern.permute.xlu0 0
        %1049 = vperm.xlu0 %1048, %v361
        %v1050 = vpop.permute.xlu0 %1049
        %1053 = vset.pattern.permute.xlu0 0
        %1054 = vperm.xlu0 %1053, %v362
        %v1055 = vpop.permute.xlu0 %1054
        %v1058 = vsel %vm610, %v339, 0
        %v1061 = vsel %vm610, %v340, 0
        %v1064 = vsel %vm610, %v341, 0
        %v1067 = vsel %vm610, %v342, 0
        %v1070 = vsel %vm610, %v343, 0
        %v1073 = vsel %vm610, %v344, 0
        %v1076 = vsel %vm610, %v345, 0
        %v1079 = vsel %vm610, %v346, 0
        %1081 = vmatprep.subr.mxu0 %v992
        %1082 = vmatpush1.msra.mxu0 %v991
        %1083 = vmatprep.subr.mxu0 %v994
        %1084 = vmatpush1.msra.mxu0 %v993
        %1085 = vmatprep.subr.mxu0 %v1010
        %1086 = vmatpush1.msra.mxu0 %v1010
        %1087 = vmatprep.subr.mxu0 %v1015
        %1088 = vmatpush1.msra.mxu0 %v1015
        %1089 = vmatprep.subr.mxu0 0.0
        %1090 = vmatpush1.msra.mxu0 0.0
        %1091 = vmatprep.subr.mxu0 0.0
        %1092 = vmatpush1.msra.mxu0 0.0
        %1093 = vmatprep.subr.mxu0 0.0
        %1094 = vmatpush1.msra.mxu0 0.0
        %1095 = vmatprep.subr.mxu0 0.0
        %1096 = vmatpush1.msra.mxu0 0.0
        %1097 = vmatprep.subr.mxu0 0.0
        %1098 = vmatpush1.msra.mxu0 0.0
        %1099 = vmatprep.subr.mxu0 0.0
        %1100 = vmatpush1.msra.mxu0 0.0
        %1101 = vmatprep.subr.mxu0 0.0
        %1102 = vmatpush1.msra.mxu0 0.0
        %1103 = vmatprep.subr.mxu0 0.0
        %1104 = vmatpush1.msra.mxu0 0.0
        %1105 = vmatprep.subr.mxu0 0.0
        %1106 = vmatpush1.msra.mxu0 0.0
        %1107 = vmatprep.subr.mxu0 0.0
        %1108 = vmatpush1.msra.mxu0 0.0
        %1109 = vmatprep.subr.mxu0 0.0
        %1110 = vmatpush1.msra.mxu0 0.0
        %1111 = vmatprep.subr.mxu0 0.0
        %1112 = vmatpush1.msra.mxu0 0.0
        %1113 = vmatprep.subr.mxu0 0.0
        %1114 = vmatpush1.msra.mxu0 0.0
        %1115 = vmatprep.subr.mxu0 0.0
        %1116 = vmatpush1.msra.mxu0 0.0
        %1117 = vmatprep.subr.mxu0 0.0
        %1118 = vmatpush1.msra.mxu0 0.0
        %1119 = vmatprep.subr.mxu0 0.0
        %1120 = vmatpush1.msra.mxu0 0.0
        %1121 = vmatprep.subr.mxu0 0.0
        %1122 = vmatpush1.msra.mxu0 0.0
        %1123 = vmatprep.subr.mxu0 0.0
        %1124 = vmatpush1.msra.mxu0 0.0
        %1125 = vmatprep.subr.mxu0 0.0
        %1126 = vmatpush1.msra.mxu0 0.0
        %1127 = vmatprep.subr.mxu0 0.0
        %1128 = vmatpush1.msra.mxu0 0.0
        %1129 = vmatprep.subr.mxu0 0.0
        %1130 = vmatpush1.msra.mxu0 0.0
        %1131 = vmatprep.subr.mxu0 0.0
        %1132 = vmatpush1.msra.mxu0 0.0
        %1133 = vmatprep.subr.mxu0 0.0
        %1134 = vmatpush1.msra.mxu0 0.0
        %1135 = vmatprep.subr.mxu0 0.0
        %1136 = vmatpush1.msra.mxu0 0.0
        %1137 = vmatprep.subr.mxu0 0.0
        %1138 = vmatpush1.msra.mxu0 0.0
        %1139 = vmatprep.subr.mxu0 0.0
        %1140 = vmatpush1.msra.mxu0 0.0
        %1141 = vmatprep.subr.mxu0 0.0
        %1142 = vmatpush1.msra.mxu0 0.0
        %1143 = vmatprep.subr.mxu0 0.0
        %1144 = vmatpush1.msra.mxu0 0.0
        %1145 = vmatprep.mubr.f32.mxu0 0.0
        %1146 = vmatmul.mubr.f32.gmra.mrb[0].mxu0 %v1058
        %v1147 = vpop.f32.mrb[0].mxu0
        %v1148 = vadd.f32 %v1020, %v1147
        %v1149 = vpop.f32.mrb[0].mxu0
        %v1150 = vadd.f32 %v1020, %v1149
        %1151 = vmatprep.mubr.f32.mxu0 0.0
        %1152 = vmatmul.mubr.f32.gmra.mrb[0].mxu0 %v1061
        %v1153 = vpop.f32.mrb[0].mxu0
        %v1154 = vadd.f32 %v1025, %v1153
        %v1155 = vpop.f32.mrb[0].mxu0
        %v1156 = vadd.f32 %v1025, %v1155
        %1157 = vmatprep.mubr.f32.mxu0 0.0
        %1158 = vmatmul.mubr.f32.gmra.mrb[0].mxu0 %v1064
        %v1159 = vpop.f32.mrb[0].mxu0
        %v1160 = vadd.f32 %v1030, %v1159
        %v1161 = vpop.f32.mrb[0].mxu0
        %v1162 = vadd.f32 %v1030, %v1161
        %1163 = vmatprep.mubr.f32.mxu0 0.0
        %1164 = vmatmul.mubr.f32.gmra.mrb[0].mxu0 %v1067
        %v1165 = vpop.f32.mrb[0].mxu0
        %v1166 = vadd.f32 %v1035, %v1165
        %v1167 = vpop.f32.mrb[0].mxu0
        %v1168 = vadd.f32 %v1035, %v1167
        %1169 = vmatprep.mubr.f32.mxu0 0.0
        %1170 = vmatmul.mubr.f32.gmra.mrb[0].mxu0 %v1070
        %v1171 = vpop.f32.mrb[0].mxu0
        %v1172 = vadd.f32 %v1040, %v1171
        %v1173 = vpop.f32.mrb[0].mxu0
        %v1174 = vadd.f32 %v1040, %v1173
        %1175 = vmatprep.mubr.f32.mxu0 0.0
        %1176 = vmatmul.mubr.f32.gmra.mrb[0].mxu0 %v1073
        %v1177 = vpop.f32.mrb[0].mxu0
        %v1178 = vadd.f32 %v1045, %v1177
        %v1179 = vpop.f32.mrb[0].mxu0
        %v1180 = vadd.f32 %v1045, %v1179
        %1181 = vmatprep.mubr.f32.mxu0 0.0
        %1182 = vmatmul.mubr.f32.gmra.mrb[0].mxu0 %v1076
        %v1183 = vpop.f32.mrb[0].mxu0
        %v1184 = vadd.f32 %v1050, %v1183
        %v1185 = vpop.f32.mrb[0].mxu0
        %v1186 = vadd.f32 %v1050, %v1185
        %1187 = vmatprep.mubr.f32.mxu0 0.0
        %1188 = vmatmul.mubr.f32.gmra.mrb[0].mxu0 %v1079
        %v1189 = vpop.f32.mrb[0].mxu0
        %v1190 = vadd.f32 %v1055, %v1189
        %v1191 = vpop.f32.mrb[0].mxu0
        %v1192 = vadd.f32 %v1055, %v1191
        %1193 = vdwg.mxu0
        %v1194 = vxor.u32 %v1148, 2147483648
        %v1195 = vxor.u32 %v1150, 2147483648
        %v1196 = vxor.u32 %v1154, 2147483648
        %v1197 = vxor.u32 %v1156, 2147483648
        %v1198 = vxor.u32 %v1160, 2147483648
        %v1199 = vxor.u32 %v1162, 2147483648
        %v1200 = vxor.u32 %v1166, 2147483648
        %v1201 = vxor.u32 %v1168, 2147483648
        %v1202 = vxor.u32 %v1172, 2147483648
        %v1203 = vxor.u32 %v1174, 2147483648
        %v1204 = vxor.u32 %v1178, 2147483648
        %v1205 = vxor.u32 %v1180, 2147483648
        %v1206 = vxor.u32 %v1184, 2147483648
        %v1207 = vxor.u32 %v1186, 2147483648
        %v1208 = vxor.u32 %v1190, 2147483648
        %v1209 = vxor.u32 %v1192, 2147483648
        %v1210 = vmul.f32 %v1194, 1.442695
        %v1211 = vpow.pop %v1210
        %v1212 = vmul.f32 %v1195, 1.442695
        %v1213 = vpow.pop %v1212
        %v1214 = vmul.f32 %v1196, 1.442695
        %v1215 = vpow.pop %v1214
        %v1216 = vmul.f32 %v1197, 1.442695
        %v1217 = vpow.pop %v1216
        %v1218 = vmul.f32 %v1198, 1.442695
        %v1219 = vpow.pop %v1218
        %v1220 = vmul.f32 %v1199, 1.442695
        %v1221 = vpow.pop %v1220
        %v1222 = vmul.f32 %v1200, 1.442695
        %v1223 = vpow.pop %v1222
        %v1224 = vmul.f32 %v1201, 1.442695
        %v1225 = vpow.pop %v1224
        %v1226 = vmul.f32 %v1202, 1.442695
        %v1227 = vpow.pop %v1226
        %v1228 = vmul.f32 %v1203, 1.442695
        %v1229 = vpow.pop %v1228
        %v1230 = vmul.f32 %v1204, 1.442695
        %v1231 = vpow.pop %v1230
        %v1232 = vmul.f32 %v1205, 1.442695
        %v1233 = vpow.pop %v1232
        %v1234 = vmul.f32 %v1206, 1.442695
        %v1235 = vpow.pop %v1234
        %v1236 = vmul.f32 %v1207, 1.442695
        %v1237 = vpow.pop %v1236
        %v1238 = vmul.f32 %v1208, 1.442695
        %v1239 = vpow.pop %v1238
        %v1240 = vmul.f32 %v1209, 1.442695
        %v1241 = vpow.pop %v1240
        %v1242 = vadd.f32 %v1211, 1.0
        %v1243 = vadd.f32 %v1213, 1.0
        %v1244 = vadd.f32 %v1215, 1.0
        %v1245 = vadd.f32 %v1217, 1.0
        %v1246 = vadd.f32 %v1219, 1.0
        %v1247 = vadd.f32 %v1221, 1.0
        %v1248 = vadd.f32 %v1223, 1.0
        %v1249 = vadd.f32 %v1225, 1.0
        %v1250 = vadd.f32 %v1227, 1.0
        %v1251 = vadd.f32 %v1229, 1.0
        %v1252 = vadd.f32 %v1231, 1.0
        %v1253 = vadd.f32 %v1233, 1.0
        %v1254 = vadd.f32 %v1235, 1.0
        %v1255 = vadd.f32 %v1237, 1.0
        %v1256 = vadd.f32 %v1239, 1.0
        %v1257 = vadd.f32 %v1241, 1.0
        %v1258 = vrcp.pop %v1242
        %v1259 = vmul.f32 1.0, %v1258
        %v1260 = vrcp.pop %v1243
        %v1261 = vmul.f32 1.0, %v1260
        %v1262 = vrcp.pop %v1244
        %v1263 = vmul.f32 1.0, %v1262
        %v1264 = vrcp.pop %v1245
        %v1265 = vmul.f32 1.0, %v1264
        %v1266 = vrcp.pop %v1246
        %v1267 = vmul.f32 1.0, %v1266
        %v1268 = vrcp.pop %v1247
        %v1269 = vmul.f32 1.0, %v1268
        %v1270 = vrcp.pop %v1248
        %v1271 = vmul.f32 1.0, %v1270
        %v1272 = vrcp.pop %v1249
        %v1273 = vmul.f32 1.0, %v1272
        %v1274 = vrcp.pop %v1250
        %v1275 = vmul.f32 1.0, %v1274
        %v1276 = vrcp.pop %v1251
        %v1277 = vmul.f32 1.0, %v1276
        %v1278 = vrcp.pop %v1252
        %v1279 = vmul.f32 1.0, %v1278
        %v1280 = vrcp.pop %v1253
        %v1281 = vmul.f32 1.0, %v1280
        %v1282 = vrcp.pop %v1254
        %v1283 = vmul.f32 1.0, %v1282
        %v1284 = vrcp.pop %v1255
        %v1285 = vmul.f32 1.0, %v1284
        %v1286 = vrcp.pop %v1256
        %v1287 = vmul.f32 1.0, %v1286
        %v1288 = vrcp.pop %v1257
        %v1289 = vmul.f32 1.0, %v1288
        %v1290 = vmul.f32 %v395, %v1259
        %v1291 = vmul.f32 %v396, %v1261
        %v1292 = vmul.f32 %v397, %v1263
        %v1293 = vmul.f32 %v398, %v1265
        %v1294 = vmul.f32 %v399, %v1267
        %v1295 = vmul.f32 %v400, %v1269
        %v1296 = vmul.f32 %v401, %v1271
        %v1297 = vmul.f32 %v402, %v1273
        %v1298 = vmul.f32 %v403, %v1275
        %v1299 = vmul.f32 %v404, %v1277
        %v1300 = vmul.f32 %v405, %v1279
        %v1301 = vmul.f32 %v406, %v1281
        %v1302 = vmul.f32 %v407, %v1283
        %v1303 = vmul.f32 %v408, %v1285
        %v1304 = vmul.f32 %v409, %v1287
        %v1305 = vmul.f32 %v410, %v1289
        %v1306 = vadd.f32 %v379, %v1290
        %v1307 = vadd.f32 %v380, %v1291
        %v1308 = vadd.f32 %v381, %v1292
        %v1309 = vadd.f32 %v382, %v1293
        %v1310 = vadd.f32 %v383, %v1294
        %v1311 = vadd.f32 %v384, %v1295
        %v1312 = vadd.f32 %v385, %v1296
        %v1313 = vadd.f32 %v386, %v1297
        %v1314 = vadd.f32 %v387, %v1298
        %v1315 = vadd.f32 %v388, %v1299
        %v1316 = vadd.f32 %v389, %v1300
        %v1317 = vadd.f32 %v390, %v1301
        %v1318 = vadd.f32 %v391, %v1302
        %v1319 = vadd.f32 %v392, %v1303
        %v1320 = vadd.f32 %v393, %v1304
        %v1321 = vadd.f32 %v394, %v1305
        %1322 = vst [vmem:[%s311] sm:$0xff] %v1306
        %1323 = vst [vmem:[%s311 + $0x8] sm:$0xff] %v1307
        %1324 = vst [vmem:[%s311 + $0x10] sm:$0xff] %v1308
        %1325 = vst [vmem:[%s311 + $0x18] sm:$0xff] %v1309
        %1326 = vst [vmem:[%s311 + $0x20] sm:$0xff] %v1310
        %1327 = vst [vmem:[%s311 + $0x28] sm:$0xff] %v1311
        %1328 = vst [vmem:[%s311 + $0x30] sm:$0xff] %v1312
        %1329 = vst [vmem:[%s311 + $0x38] sm:$0xff] %v1313
        %1330 = vst [vmem:[%s311 + $0x40] sm:$0xff] %v1314
        %1331 = vst [vmem:[%s311 + $0x48] sm:$0xff] %v1315
        %1332 = vst [vmem:[%s311 + $0x50] sm:$0xff] %v1316
        %1333 = vst [vmem:[%s311 + $0x58] sm:$0xff] %v1317
        %1334 = vst [vmem:[%s311 + $0x60] sm:$0xff] %v1318
        %1335 = vst [vmem:[%s311 + $0x68] sm:$0xff] %v1319
        %1336 = vst [vmem:[%s311 + $0x70] sm:$0xff] %v1320
        %1337 = vst [vmem:[%s311 + $0x78] sm:$0xff] %v1321
        %s1338 = scalar_lea.vmem %s269, 128 [#allocation2]
        %v1339 = vld [vmem:[%s1338] sm:$0xff]
        %v1340 = vld [vmem:[%s1338 + $0x8] sm:$0xff]
        %v1341 = vld [vmem:[%s1338 + $0x10] sm:$0xff]
        %v1342 = vld [vmem:[%s1338 + $0x18] sm:$0xff]
        %v1343 = vld [vmem:[%s1338 + $0x20] sm:$0xff]
        %v1344 = vld [vmem:[%s1338 + $0x28] sm:$0xff]
        %v1345 = vld [vmem:[%s1338 + $0x30] sm:$0xff]
        %v1346 = vld [vmem:[%s1338 + $0x38] sm:$0xff]
        %v1347 = vld [vmem:[%s1338 + $0x40] sm:$0xff]
        %v1348 = vld [vmem:[%s1338 + $0x48] sm:$0xff]
        %v1349 = vld [vmem:[%s1338 + $0x50] sm:$0xff]
        %v1350 = vld [vmem:[%s1338 + $0x58] sm:$0xff]
        %v1351 = vld [vmem:[%s1338 + $0x60] sm:$0xff]
        %v1352 = vld [vmem:[%s1338 + $0x68] sm:$0xff]
        %v1353 = vld [vmem:[%s1338 + $0x70] sm:$0xff]
        %v1354 = vld [vmem:[%s1338 + $0x78] sm:$0xff]
        %s1355 = scalar_lea.vmem %s278, 128 [#allocation5]
        %v1356 = vld [vmem:[%s1355] sm:$0xff]
        %v1357 = vld [vmem:[%s1355 + $0x8] sm:$0xff]
        %v1358 = vld [vmem:[%s1355 + $0x10] sm:$0xff]
        %v1359 = vld [vmem:[%s1355 + $0x18] sm:$0xff]
        %v1360 = vld [vmem:[%s1355 + $0x20] sm:$0xff]
        %v1361 = vld [vmem:[%s1355 + $0x28] sm:$0xff]
        %v1362 = vld [vmem:[%s1355 + $0x30] sm:$0xff]
        %v1363 = vld [vmem:[%s1355 + $0x38] sm:$0xff]
        %v1364 = vld [vmem:[%s1355 + $0x40] sm:$0xff]
        %v1365 = vld [vmem:[%s1355 + $0x48] sm:$0xff]
        %v1366 = vld [vmem:[%s1355 + $0x50] sm:$0xff]
        %v1367 = vld [vmem:[%s1355 + $0x58] sm:$0xff]
        %v1368 = vld [vmem:[%s1355 + $0x60] sm:$0xff]
        %v1369 = vld [vmem:[%s1355 + $0x68] sm:$0xff]
        %v1370 = vld [vmem:[%s1355 + $0x70] sm:$0xff]
        %v1371 = vld [vmem:[%s1355 + $0x78] sm:$0xff]
        %v1372 = vsub.f32 %v1339, %v1356
        %v1373 = vsub.f32 %v1340, %v1357
        %v1374 = vsub.f32 %v1341, %v1358
        %v1375 = vsub.f32 %v1342, %v1359
        %v1376 = vsub.f32 %v1343, %v1360
        %v1377 = vsub.f32 %v1344, %v1361
        %v1378 = vsub.f32 %v1345, %v1362
        %v1379 = vsub.f32 %v1346, %v1363
        %v1380 = vsub.f32 %v1347, %v1364
        %v1381 = vsub.f32 %v1348, %v1365
        %v1382 = vsub.f32 %v1349, %v1366
        %v1383 = vsub.f32 %v1350, %v1367
        %v1384 = vsub.f32 %v1351, %v1368
        %v1385 = vsub.f32 %v1352, %v1369
        %v1386 = vsub.f32 %v1353, %v1370
        %v1387 = vsub.f32 %v1354, %v1371
        %v1388 = vadd.f32 %v1339, %v1356
        %v1389 = vadd.f32 %v1340, %v1357
        %v1390 = vadd.f32 %v1341, %v1358
        %v1391 = vadd.f32 %v1342, %v1359
        %v1392 = vadd.f32 %v1343, %v1360
        %v1393 = vadd.f32 %v1344, %v1361
        %v1394 = vadd.f32 %v1345, %v1362
        %v1395 = vadd.f32 %v1346, %v1363
        %v1396 = vadd.f32 %v1347, %v1364
        %v1397 = vadd.f32 %v1348, %v1365
        %v1398 = vadd.f32 %v1349, %v1366
        %v1399 = vadd.f32 %v1350, %v1367
        %v1400 = vadd.f32 %v1351, %v1368
        %v1401 = vadd.f32 %v1352, %v1369
        %v1402 = vadd.f32 %v1353, %v1370
        %v1403 = vadd.f32 %v1354, %v1371
        %1404 = vmatprep.subr.mxu0 %v1389
        %1405 = vmatpush1.msra.mxu0 %v1388
        %1406 = vmatprep.subr.mxu0 %v1391
        %1407 = vmatpush1.msra.mxu0 %v1390
        %1408 = vmatprep.subr.mxu0 %v1393
        %1409 = vmatpush1.msra.mxu0 %v1392
        %1410 = vmatprep.subr.mxu0 %v1395
        %1411 = vmatpush1.msra.mxu0 %v1394
        %1412 = vmatprep.subr.mxu0 %v1397
        %1413 = vmatpush1.msra.mxu0 %v1396
        %1414 = vmatprep.subr.mxu0 %v1399
        %1415 = vmatpush1.msra.mxu0 %v1398
        %1416 = vmatprep.subr.mxu0 %v1401
        %1417 = vmatpush1.msra.mxu0 %v1400
        %1418 = vmatprep.subr.mxu0 %v1403
        %1419 = vmatpush1.msra.mxu0 %v1402
        %1420 = vmatprep.subr.mxu0 0.0
        %1421 = vmatpush1.msra.mxu0 0.0
        %1422 = vmatprep.subr.mxu0 0.0
        %1423 = vmatpush1.msra.mxu0 0.0
        %1424 = vmatprep.subr.mxu0 0.0
        %1425 = vmatpush1.msra.mxu0 0.0
        %1426 = vmatprep.subr.mxu0 0.0
        %1427 = vmatpush1.msra.mxu0 0.0
        %1428 = vmatprep.subr.mxu0 0.0
        %1429 = vmatpush1.msra.mxu0 0.0
        %1430 = vmatprep.subr.mxu0 0.0
        %1431 = vmatpush1.msra.mxu0 0.0
        %1432 = vmatprep.subr.mxu0 0.0
        %1433 = vmatpush1.msra.mxu0 0.0
        %1434 = vmatprep.subr.mxu0 0.0
        %1435 = vmatpush1.msra.mxu0 0.0
        %1436 = vmatprep.subr.mxu0 0.0
        %1437 = vmatpush1.msra.mxu0 0.0
        %1438 = vmatprep.subr.mxu0 0.0
        %1439 = vmatpush1.msra.mxu0 0.0
        %1440 = vmatprep.subr.mxu0 0.0
        %1441 = vmatpush1.msra.mxu0 0.0
        %1442 = vmatprep.subr.mxu0 0.0
        %1443 = vmatpush1.msra.mxu0 0.0
        %1444 = vmatprep.subr.mxu0 0.0
        %1445 = vmatpush1.msra.mxu0 0.0
        %1446 = vmatprep.subr.mxu0 0.0
        %1447 = vmatpush1.msra.mxu0 0.0
        %1448 = vmatprep.subr.mxu0 0.0
        %1449 = vmatpush1.msra.mxu0 0.0
        %1450 = vmatprep.subr.mxu0 0.0
        %1451 = vmatpush1.msra.mxu0 0.0
        %1452 = vmatprep.subr.mxu0 0.0
        %1453 = vmatpush1.msra.mxu0 0.0
        %1454 = vmatprep.subr.mxu0 0.0
        %1455 = vmatpush1.msra.mxu0 0.0
        %1456 = vmatprep.subr.mxu0 0.0
        %1457 = vmatpush1.msra.mxu0 0.0
        %1458 = vmatprep.subr.mxu0 0.0
        %1459 = vmatpush1.msra.mxu0 0.0
        %1460 = vmatprep.subr.mxu0 0.0
        %1461 = vmatpush1.msra.mxu0 0.0
        %1462 = vmatprep.subr.mxu0 0.0
        %1463 = vmatpush1.msra.mxu0 0.0
        %1464 = vmatprep.subr.mxu0 0.0
        %1465 = vmatpush1.msra.mxu0 0.0
        %1466 = vmatprep.subr.mxu0 0.0
        %1467 = vmatpush1.msra.mxu0 0.0
        %1468 = vmatprep.mubr.f32.mxu0 0.0
        %1469 = vmatmul.mubr.f32.gmra.mrb[0].mxu0 %v429
        %v1470 = vpop.f32.mrb[0].mxu0
        %v1471 = vadd.f32 0.0, %v1470
        %v1472 = vpop.f32.mrb[0].mxu0
        %v1473 = vadd.f32 0.0, %v1472
        %1474 = vmatprep.mubr.f32.mxu0 0.0
        %1475 = vmatmul.mubr.f32.gmra.mrb[0].mxu0 %v432
        %v1476 = vpop.f32.mrb[0].mxu0
        %v1477 = vadd.f32 0.0, %v1476
        %v1478 = vpop.f32.mrb[0].mxu0
        %v1479 = vadd.f32 0.0, %v1478
        %1480 = vmatprep.mubr.f32.mxu0 0.0
        %1481 = vmatmul.mubr.f32.gmra.mrb[0].mxu0 %v435
        %v1482 = vpop.f32.mrb[0].mxu0
        %v1483 = vadd.f32 0.0, %v1482
        %v1484 = vpop.f32.mrb[0].mxu0
        %v1485 = vadd.f32 0.0, %v1484
        %1486 = vmatprep.mubr.f32.mxu0 0.0
        %1487 = vmatmul.mubr.f32.gmra.mrb[0].mxu0 %v438
        %v1488 = vpop.f32.mrb[0].mxu0
        %v1489 = vadd.f32 0.0, %v1488
        %v1490 = vpop.f32.mrb[0].mxu0
        %v1491 = vadd.f32 0.0, %v1490
        %1492 = vdwg.mxu0
        %v1493 = vadd.f32 %v1471, %v532
        %v1494 = vadd.f32 %v1473, %v532
        %v1495 = vadd.f32 %v1477, %v537
        %v1496 = vadd.f32 %v1479, %v537
        %v1497 = vmax.f32 %v1493, 0.0
        %v1498 = vmax.f32 %v1494, 0.0
        %v1499 = vmax.f32 %v1495, 0.0
        %v1500 = vmax.f32 %v1496, 0.0
        %v1501 = vadd.f32 %v1483, %v1485
        %1502 = vadd.xlane.f32.xlu0 %v1501
        %v1503 = vpop.xlane.xlu0 %1502
        %v1504 = vadd.f32 %v1489, %v1491
        %1505 = vadd.xlane.f32.xlu0 %v1504
        %v1506 = vpop.xlane.xlu0 %1505
        %v1507 = vmul.f32 %v1503, %v553
        %v1508 = vmul.f32 %v1506, %v553
        %v1509 = vadd.f32 %v1507, %v325
        %v1510 = vadd.f32 %v1508, %v326
        %v1511 = vmax.f32 %v1509, 0.0
        %v1512 = vmax.f32 %v1510, 0.0
        %1514 = vset.pattern.permute.xlu0 0
        %1515 = vperm.xlu0 %1514, %v1511
        %v1516 = vpop.permute.xlu0 %1515
        %1519 = vset.pattern.permute.xlu0 0
        %1520 = vperm.xlu0 %1519, %v1512
        %v1521 = vpop.permute.xlu0 %1520
        %1523 = vmatprep.subr.mxu0 %v1498
        %1524 = vmatpush1.msra.mxu0 %v1497
        %1525 = vmatprep.subr.mxu0 %v1500
        %1526 = vmatpush1.msra.mxu0 %v1499
        %1527 = vmatprep.subr.mxu0 %v1516
        %1528 = vmatpush1.msra.mxu0 %v1516
        %1529 = vmatprep.subr.mxu0 %v1521
        %1530 = vmatpush1.msra.mxu0 %v1521
        %1531 = vmatprep.subr.mxu0 0.0
        %1532 = vmatpush1.msra.mxu0 0.0
        %1533 = vmatprep.subr.mxu0 0.0
        %1534 = vmatpush1.msra.mxu0 0.0
        %1535 = vmatprep.subr.mxu0 0.0
        %1536 = vmatpush1.msra.mxu0 0.0
        %1537 = vmatprep.subr.mxu0 0.0
        %1538 = vmatpush1.msra.mxu0 0.0
        %1539 = vmatprep.subr.mxu0 0.0
        %1540 = vmatpush1.msra.mxu0 0.0
        %1541 = vmatprep.subr.mxu0 0.0
        %1542 = vmatpush1.msra.mxu0 0.0
        %1543 = vmatprep.subr.mxu0 0.0
        %1544 = vmatpush1.msra.mxu0 0.0
        %1545 = vmatprep.subr.mxu0 0.0
        %1546 = vmatpush1.msra.mxu0 0.0
        %1547 = vmatprep.subr.mxu0 0.0
        %1548 = vmatpush1.msra.mxu0 0.0
        %1549 = vmatprep.subr.mxu0 0.0
        %1550 = vmatpush1.msra.mxu0 0.0
        %1551 = vmatprep.subr.mxu0 0.0
        %1552 = vmatpush1.msra.mxu0 0.0
        %1553 = vmatprep.subr.mxu0 0.0
        %1554 = vmatpush1.msra.mxu0 0.0
        %1555 = vmatprep.subr.mxu0 0.0
        %1556 = vmatpush1.msra.mxu0 0.0
        %1557 = vmatprep.subr.mxu0 0.0
        %1558 = vmatpush1.msra.mxu0 0.0
        %1559 = vmatprep.subr.mxu0 0.0
        %1560 = vmatpush1.msra.mxu0 0.0
        %1561 = vmatprep.subr.mxu0 0.0
        %1562 = vmatpush1.msra.mxu0 0.0
        %1563 = vmatprep.subr.mxu0 0.0
        %1564 = vmatpush1.msra.mxu0 0.0
        %1565 = vmatprep.subr.mxu0 0.0
        %1566 = vmatpush1.msra.mxu0 0.0
        %1567 = vmatprep.subr.mxu0 0.0
        %1568 = vmatpush1.msra.mxu0 0.0
        %1569 = vmatprep.subr.mxu0 0.0
        %1570 = vmatpush1.msra.mxu0 0.0
        %1571 = vmatprep.subr.mxu0 0.0
        %1572 = vmatpush1.msra.mxu0 0.0
        %1573 = vmatprep.subr.mxu0 0.0
        %1574 = vmatpush1.msra.mxu0 0.0
        %1575 = vmatprep.subr.mxu0 0.0
        %1576 = vmatpush1.msra.mxu0 0.0
        %1577 = vmatprep.subr.mxu0 0.0
        %1578 = vmatpush1.msra.mxu0 0.0
        %1579 = vmatprep.subr.mxu0 0.0
        %1580 = vmatpush1.msra.mxu0 0.0
        %1581 = vmatprep.subr.mxu0 0.0
        %1582 = vmatpush1.msra.mxu0 0.0
        %1583 = vmatprep.subr.mxu0 0.0
        %1584 = vmatpush1.msra.mxu0 0.0
        %1585 = vmatprep.subr.mxu0 0.0
        %1586 = vmatpush1.msra.mxu0 0.0
        %1587 = vmatprep.mubr.f32.mxu0 0.0
        %1588 = vmatmul.mubr.f32.gmra.mrb[0].mxu0 %v612
        %v1589 = vpop.f32.mrb[0].mxu0
        %v1590 = vadd.f32 %v573, %v1589
        %v1591 = vpop.f32.mrb[0].mxu0
        %v1592 = vadd.f32 %v573, %v1591
        %1593 = vmatprep.mubr.f32.mxu0 0.0
        %1594 = vmatmul.mubr.f32.gmra.mrb[0].mxu0 %v615
        %v1595 = vpop.f32.mrb[0].mxu0
        %v1596 = vadd.f32 %v578, %v1595
        %v1597 = vpop.f32.mrb[0].mxu0
        %v1598 = vadd.f32 %v578, %v1597
        %1599 = vmatprep.mubr.f32.mxu0 0.0
        %1600 = vmatmul.mubr.f32.gmra.mrb[0].mxu0 %v618
        %v1601 = vpop.f32.mrb[0].mxu0
        %v1602 = vadd.f32 %v583, %v1601
        %v1603 = vpop.f32.mrb[0].mxu0
        %v1604 = vadd.f32 %v583, %v1603
        %1605 = vmatprep.mubr.f32.mxu0 0.0
        %1606 = vmatmul.mubr.f32.gmra.mrb[0].mxu0 %v621
        %v1607 = vpop.f32.mrb[0].mxu0
        %v1608 = vadd.f32 %v588, %v1607
        %v1609 = vpop.f32.mrb[0].mxu0
        %v1610 = vadd.f32 %v588, %v1609
        %1611 = vmatprep.mubr.f32.mxu0 0.0
        %1612 = vmatmul.mubr.f32.gmra.mrb[0].mxu0 %v624
        %v1613 = vpop.f32.mrb[0].mxu0
        %v1614 = vadd.f32 %v593, %v1613
        %v1615 = vpop.f32.mrb[0].mxu0
        %v1616 = vadd.f32 %v593, %v1615
        %1617 = vmatprep.mubr.f32.mxu0 0.0
        %1618 = vmatmul.mubr.f32.gmra.mrb[0].mxu0 %v627
        %v1619 = vpop.f32.mrb[0].mxu0
        %v1620 = vadd.f32 %v598, %v1619
        %v1621 = vpop.f32.mrb[0].mxu0
        %v1622 = vadd.f32 %v598, %v1621
        %1623 = vmatprep.mubr.f32.mxu0 0.0
        %1624 = vmatmul.mubr.f32.gmra.mrb[0].mxu0 %v630
        %v1625 = vpop.f32.mrb[0].mxu0
        %v1626 = vadd.f32 %v603, %v1625
        %v1627 = vpop.f32.mrb[0].mxu0
        %v1628 = vadd.f32 %v603, %v1627
        %1629 = vmatprep.mubr.f32.mxu0 0.0
        %1630 = vmatmul.mubr.f32.gmra.mrb[0].mxu0 %v633
        %v1631 = vpop.f32.mrb[0].mxu0
        %v1632 = vadd.f32 %v608, %v1631
        %v1633 = vpop.f32.mrb[0].mxu0
        %v1634 = vadd.f32 %v608, %v1633
        %1635 = vdwg.mxu0
        %v1636 = vxor.u32 %v1590, 2147483648
        %v1637 = vxor.u32 %v1592, 2147483648
        %v1638 = vxor.u32 %v1596, 2147483648
        %v1639 = vxor.u32 %v1598, 2147483648
        %v1640 = vxor.u32 %v1602, 2147483648
        %v1641 = vxor.u32 %v1604, 2147483648
        %v1642 = vxor.u32 %v1608, 2147483648
        %v1643 = vxor.u32 %v1610, 2147483648
        %v1644 = vxor.u32 %v1614, 2147483648
        %v1645 = vxor.u32 %v1616, 2147483648
        %v1646 = vxor.u32 %v1620, 2147483648
        %v1647 = vxor.u32 %v1622, 2147483648
        %v1648 = vxor.u32 %v1626, 2147483648
        %v1649 = vxor.u32 %v1628, 2147483648
        %v1650 = vxor.u32 %v1632, 2147483648
        %v1651 = vxor.u32 %v1634, 2147483648
        %v1652 = vmul.f32 %v1636, 1.442695
        %v1653 = vpow.pop %v1652
        %v1654 = vmul.f32 %v1637, 1.442695
        %v1655 = vpow.pop %v1654
        %v1656 = vmul.f32 %v1638, 1.442695
        %v1657 = vpow.pop %v1656
        %v1658 = vmul.f32 %v1639, 1.442695
        %v1659 = vpow.pop %v1658
        %v1660 = vmul.f32 %v1640, 1.442695
        %v1661 = vpow.pop %v1660
        %v1662 = vmul.f32 %v1641, 1.442695
        %v1663 = vpow.pop %v1662
        %v1664 = vmul.f32 %v1642, 1.442695
        %v1665 = vpow.pop %v1664
        %v1666 = vmul.f32 %v1643, 1.442695
        %v1667 = vpow.pop %v1666
        %v1668 = vmul.f32 %v1644, 1.442695
        %v1669 = vpow.pop %v1668
        %v1670 = vmul.f32 %v1645, 1.442695
        %v1671 = vpow.pop %v1670
        %v1672 = vmul.f32 %v1646, 1.442695
        %v1673 = vpow.pop %v1672
        %v1674 = vmul.f32 %v1647, 1.442695
        %v1675 = vpow.pop %v1674
        %v1676 = vmul.f32 %v1648, 1.442695
        %v1677 = vpow.pop %v1676
        %v1678 = vmul.f32 %v1649, 1.442695
        %v1679 = vpow.pop %v1678
        %v1680 = vmul.f32 %v1650, 1.442695
        %v1681 = vpow.pop %v1680
        %v1682 = vmul.f32 %v1651, 1.442695
        %v1683 = vpow.pop %v1682
        %v1684 = vadd.f32 %v1653, 1.0
        %v1685 = vadd.f32 %v1655, 1.0
        %v1686 = vadd.f32 %v1657, 1.0
        %v1687 = vadd.f32 %v1659, 1.0
        %v1688 = vadd.f32 %v1661, 1.0
        %v1689 = vadd.f32 %v1663, 1.0
        %v1690 = vadd.f32 %v1665, 1.0
        %v1691 = vadd.f32 %v1667, 1.0
        %v1692 = vadd.f32 %v1669, 1.0
        %v1693 = vadd.f32 %v1671, 1.0
        %v1694 = vadd.f32 %v1673, 1.0
        %v1695 = vadd.f32 %v1675, 1.0
        %v1696 = vadd.f32 %v1677, 1.0
        %v1697 = vadd.f32 %v1679, 1.0
        %v1698 = vadd.f32 %v1681, 1.0
        %v1699 = vadd.f32 %v1683, 1.0
        %v1700 = vrcp.pop %v1684
        %v1701 = vmul.f32 1.0, %v1700
        %v1702 = vrcp.pop %v1685
        %v1703 = vmul.f32 1.0, %v1702
        %v1704 = vrcp.pop %v1686
        %v1705 = vmul.f32 1.0, %v1704
        %v1706 = vrcp.pop %v1687
        %v1707 = vmul.f32 1.0, %v1706
        %v1708 = vrcp.pop %v1688
        %v1709 = vmul.f32 1.0, %v1708
        %v1710 = vrcp.pop %v1689
        %v1711 = vmul.f32 1.0, %v1710
        %v1712 = vrcp.pop %v1690
        %v1713 = vmul.f32 1.0, %v1712
        %v1714 = vrcp.pop %v1691
        %v1715 = vmul.f32 1.0, %v1714
        %v1716 = vrcp.pop %v1692
        %v1717 = vmul.f32 1.0, %v1716
        %v1718 = vrcp.pop %v1693
        %v1719 = vmul.f32 1.0, %v1718
        %v1720 = vrcp.pop %v1694
        %v1721 = vmul.f32 1.0, %v1720
        %v1722 = vrcp.pop %v1695
        %v1723 = vmul.f32 1.0, %v1722
        %v1724 = vrcp.pop %v1696
        %v1725 = vmul.f32 1.0, %v1724
        %v1726 = vrcp.pop %v1697
        %v1727 = vmul.f32 1.0, %v1726
        %v1728 = vrcp.pop %v1698
        %v1729 = vmul.f32 1.0, %v1728
        %v1730 = vrcp.pop %v1699
        %v1731 = vmul.f32 1.0, %v1730
        %v1732 = vmul.f32 %v1372, %v1701
        %v1733 = vmul.f32 %v1373, %v1703
        %v1734 = vmul.f32 %v1374, %v1705
        %v1735 = vmul.f32 %v1375, %v1707
        %v1736 = vmul.f32 %v1376, %v1709
        %v1737 = vmul.f32 %v1377, %v1711
        %v1738 = vmul.f32 %v1378, %v1713
        %v1739 = vmul.f32 %v1379, %v1715
        %v1740 = vmul.f32 %v1380, %v1717
        %v1741 = vmul.f32 %v1381, %v1719
        %v1742 = vmul.f32 %v1382, %v1721
        %v1743 = vmul.f32 %v1383, %v1723
        %v1744 = vmul.f32 %v1384, %v1725
        %v1745 = vmul.f32 %v1385, %v1727
        %v1746 = vmul.f32 %v1386, %v1729
        %v1747 = vmul.f32 %v1387, %v1731
        %v1748 = vadd.f32 %v1356, %v1732
        %v1749 = vadd.f32 %v1357, %v1733
        %v1750 = vadd.f32 %v1358, %v1734
        %v1751 = vadd.f32 %v1359, %v1735
        %v1752 = vadd.f32 %v1360, %v1736
        %v1753 = vadd.f32 %v1361, %v1737
        %v1754 = vadd.f32 %v1362, %v1738
        %v1755 = vadd.f32 %v1363, %v1739
        %v1756 = vadd.f32 %v1364, %v1740
        %v1757 = vadd.f32 %v1365, %v1741
        %v1758 = vadd.f32 %v1366, %v1742
        %v1759 = vadd.f32 %v1367, %v1743
        %v1760 = vadd.f32 %v1368, %v1744
        %v1761 = vadd.f32 %v1369, %v1745
        %v1762 = vadd.f32 %v1370, %v1746
        %v1763 = vadd.f32 %v1371, %v1747
        %1764 = vmatprep.subr.mxu0 %v1749
        %1765 = vmatpush1.msra.mxu0 %v1748
        %1766 = vmatprep.subr.mxu0 %v1751
        %1767 = vmatpush1.msra.mxu0 %v1750
        %1768 = vmatprep.subr.mxu0 %v1753
        %1769 = vmatpush1.msra.mxu0 %v1752
        %1770 = vmatprep.subr.mxu0 %v1755
        %1771 = vmatpush1.msra.mxu0 %v1754
        %1772 = vmatprep.subr.mxu0 %v1757
        %1773 = vmatpush1.msra.mxu0 %v1756
        %1774 = vmatprep.subr.mxu0 %v1759
        %1775 = vmatpush1.msra.mxu0 %v1758
        %1776 = vmatprep.subr.mxu0 %v1761
        %1777 = vmatpush1.msra.mxu0 %v1760
        %1778 = vmatprep.subr.mxu0 %v1763
        %1779 = vmatpush1.msra.mxu0 %v1762
        %1780 = vmatprep.subr.mxu0 0.0
        %1781 = vmatpush1.msra.mxu0 0.0
        %1782 = vmatprep.subr.mxu0 0.0
        %1783 = vmatpush1.msra.mxu0 0.0
        %1784 = vmatprep.subr.mxu0 0.0
        %1785 = vmatpush1.msra.mxu0 0.0
        %1786 = vmatprep.subr.mxu0 0.0
        %1787 = vmatpush1.msra.mxu0 0.0
        %1788 = vmatprep.subr.mxu0 0.0
        %1789 = vmatpush1.msra.mxu0 0.0
        %1790 = vmatprep.subr.mxu0 0.0
        %1791 = vmatpush1.msra.mxu0 0.0
        %1792 = vmatprep.subr.mxu0 0.0
        %1793 = vmatpush1.msra.mxu0 0.0
        %1794 = vmatprep.subr.mxu0 0.0
        %1795 = vmatpush1.msra.mxu0 0.0
        %1796 = vmatprep.subr.mxu0 0.0
        %1797 = vmatpush1.msra.mxu0 0.0
        %1798 = vmatprep.subr.mxu0 0.0
        %1799 = vmatpush1.msra.mxu0 0.0
        %1800 = vmatprep.subr.mxu0 0.0
        %1801 = vmatpush1.msra.mxu0 0.0
        %1802 = vmatprep.subr.mxu0 0.0
        %1803 = vmatpush1.msra.mxu0 0.0
        %1804 = vmatprep.subr.mxu0 0.0
        %1805 = vmatpush1.msra.mxu0 0.0
        %1806 = vmatprep.subr.mxu0 0.0
        %1807 = vmatpush1.msra.mxu0 0.0
        %1808 = vmatprep.subr.mxu0 0.0
        %1809 = vmatpush1.msra.mxu0 0.0
        %1810 = vmatprep.subr.mxu0 0.0
        %1811 = vmatpush1.msra.mxu0 0.0
        %1812 = vmatprep.subr.mxu0 0.0
        %1813 = vmatpush1.msra.mxu0 0.0
        %1814 = vmatprep.subr.mxu0 0.0
        %1815 = vmatpush1.msra.mxu0 0.0
        %1816 = vmatprep.subr.mxu0 0.0
        %1817 = vmatpush1.msra.mxu0 0.0
        %1818 = vmatprep.subr.mxu0 0.0
        %1819 = vmatpush1.msra.mxu0 0.0
        %1820 = vmatprep.subr.mxu0 0.0
        %1821 = vmatpush1.msra.mxu0 0.0
        %1822 = vmatprep.subr.mxu0 0.0
        %1823 = vmatpush1.msra.mxu0 0.0
        %1824 = vmatprep.subr.mxu0 0.0
        %1825 = vmatpush1.msra.mxu0 0.0
        %1826 = vmatprep.subr.mxu0 0.0
        %1827 = vmatpush1.msra.mxu0 0.0
        %1828 = vmatprep.mubr.f32.mxu0 0.0
        %1829 = vmatmul.mubr.f32.gmra.mrb[0].mxu0 %v877
        %v1830 = vpop.f32.mrb[0].mxu0
        %v1831 = vadd.f32 0.0, %v1830
        %v1832 = vpop.f32.mrb[0].mxu0
        %v1833 = vadd.f32 0.0, %v1832
        %1834 = vmatprep.mubr.f32.mxu0 0.0
        %1835 = vmatmul.mubr.f32.gmra.mrb[0].mxu0 %v880
        %v1836 = vpop.f32.mrb[0].mxu0
        %v1837 = vadd.f32 0.0, %v1836
        %v1838 = vpop.f32.mrb[0].mxu0
        %v1839 = vadd.f32 0.0, %v1838
        %1840 = vmatprep.mubr.f32.mxu0 0.0
        %1841 = vmatmul.mubr.f32.gmra.mrb[0].mxu0 %v883
        %v1842 = vpop.f32.mrb[0].mxu0
        %v1843 = vadd.f32 0.0, %v1842
        %v1844 = vpop.f32.mrb[0].mxu0
        %v1845 = vadd.f32 0.0, %v1844
        %1846 = vmatprep.mubr.f32.mxu0 0.0
        %1847 = vmatmul.mubr.f32.gmra.mrb[0].mxu0 %v886
        %v1848 = vpop.f32.mrb[0].mxu0
        %v1849 = vadd.f32 0.0, %v1848
        %v1850 = vpop.f32.mrb[0].mxu0
        %v1851 = vadd.f32 0.0, %v1850
        %1852 = vdwg.mxu0
        %v1853 = vadd.f32 %v1831, %v980
        %v1854 = vadd.f32 %v1833, %v980
        %v1855 = vadd.f32 %v1837, %v985
        %v1856 = vadd.f32 %v1839, %v985
        %v1857 = vmax.f32 %v1853, 0.0
        %v1858 = vmax.f32 %v1854, 0.0
        %v1859 = vmax.f32 %v1855, 0.0
        %v1860 = vmax.f32 %v1856, 0.0
        %v1861 = vadd.f32 %v1843, %v1845
        %1862 = vadd.xlane.f32.xlu0 %v1861
        %v1863 = vpop.xlane.xlu0 %1862
        %v1864 = vadd.f32 %v1849, %v1851
        %1865 = vadd.xlane.f32.xlu0 %v1864
        %v1866 = vpop.xlane.xlu0 %1865
        %v1867 = vmul.f32 %v1863, %v553
        %v1868 = vmul.f32 %v1866, %v553
        %v1869 = vadd.f32 %v1867, %v329
        %v1870 = vadd.f32 %v1868, %v330
        %v1871 = vmax.f32 %v1869, 0.0
        %v1872 = vmax.f32 %v1870, 0.0
        %1874 = vset.pattern.permute.xlu0 0
        %1875 = vperm.xlu0 %1874, %v1871
        %v1876 = vpop.permute.xlu0 %1875
        %1879 = vset.pattern.permute.xlu0 0
        %1880 = vperm.xlu0 %1879, %v1872
        %v1881 = vpop.permute.xlu0 %1880
        %1883 = vmatprep.subr.mxu0 %v1858
        %1884 = vmatpush1.msra.mxu0 %v1857
        %1885 = vmatprep.subr.mxu0 %v1860
        %1886 = vmatpush1.msra.mxu0 %v1859
        %1887 = vmatprep.subr.mxu0 %v1876
        %1888 = vmatpush1.msra.mxu0 %v1876
        %1889 = vmatprep.subr.mxu0 %v1881
        %1890 = vmatpush1.msra.mxu0 %v1881
        %1891 = vmatprep.subr.mxu0 0.0
        %1892 = vmatpush1.msra.mxu0 0.0
        %1893 = vmatprep.subr.mxu0 0.0
        %1894 = vmatpush1.msra.mxu0 0.0
        %1895 = vmatprep.subr.mxu0 0.0
        %1896 = vmatpush1.msra.mxu0 0.0
        %1897 = vmatprep.subr.mxu0 0.0
        %1898 = vmatpush1.msra.mxu0 0.0
        %1899 = vmatprep.subr.mxu0 0.0
        %1900 = vmatpush1.msra.mxu0 0.0
        %1901 = vmatprep.subr.mxu0 0.0
        %1902 = vmatpush1.msra.mxu0 0.0
        %1903 = vmatprep.subr.mxu0 0.0
        %1904 = vmatpush1.msra.mxu0 0.0
        %1905 = vmatprep.subr.mxu0 0.0
        %1906 = vmatpush1.msra.mxu0 0.0
        %1907 = vmatprep.subr.mxu0 0.0
        %1908 = vmatpush1.msra.mxu0 0.0
        %1909 = vmatprep.subr.mxu0 0.0
        %1910 = vmatpush1.msra.mxu0 0.0
        %1911 = vmatprep.subr.mxu0 0.0
        %1912 = vmatpush1.msra.mxu0 0.0
        %1913 = vmatprep.subr.mxu0 0.0
        %1914 = vmatpush1.msra.mxu0 0.0
        %1915 = vmatprep.subr.mxu0 0.0
        %1916 = vmatpush1.msra.mxu0 0.0
        %1917 = vmatprep.subr.mxu0 0.0
        %1918 = vmatpush1.msra.mxu0 0.0
        %1919 = vmatprep.subr.mxu0 0.0
        %1920 = vmatpush1.msra.mxu0 0.0
        %1921 = vmatprep.subr.mxu0 0.0
        %1922 = vmatpush1.msra.mxu0 0.0
        %1923 = vmatprep.subr.mxu0 0.0
        %1924 = vmatpush1.msra.mxu0 0.0
        %1925 = vmatprep.subr.mxu0 0.0
        %1926 = vmatpush1.msra.mxu0 0.0
        %1927 = vmatprep.subr.mxu0 0.0
        %1928 = vmatpush1.msra.mxu0 0.0
        %1929 = vmatprep.subr.mxu0 0.0
        %1930 = vmatpush1.msra.mxu0 0.0
        %1931 = vmatprep.subr.mxu0 0.0
        %1932 = vmatpush1.msra.mxu0 0.0
        %1933 = vmatprep.subr.mxu0 0.0
        %1934 = vmatpush1.msra.mxu0 0.0
        %1935 = vmatprep.subr.mxu0 0.0
        %1936 = vmatpush1.msra.mxu0 0.0
        %1937 = vmatprep.subr.mxu0 0.0
        %1938 = vmatpush1.msra.mxu0 0.0
        %1939 = vmatprep.subr.mxu0 0.0
        %1940 = vmatpush1.msra.mxu0 0.0
        %1941 = vmatprep.subr.mxu0 0.0
        %1942 = vmatpush1.msra.mxu0 0.0
        %1943 = vmatprep.subr.mxu0 0.0
        %1944 = vmatpush1.msra.mxu0 0.0
        %1945 = vmatprep.subr.mxu0 0.0
        %1946 = vmatpush1.msra.mxu0 0.0
        %1947 = vmatprep.mubr.f32.mxu0 0.0
        %1948 = vmatmul.mubr.f32.gmra.mrb[0].mxu0 %v1058
        %v1949 = vpop.f32.mrb[0].mxu0
        %v1950 = vadd.f32 %v1020, %v1949
        %v1951 = vpop.f32.mrb[0].mxu0
        %v1952 = vadd.f32 %v1020, %v1951
        %1953 = vmatprep.mubr.f32.mxu0 0.0
        %1954 = vmatmul.mubr.f32.gmra.mrb[0].mxu0 %v1061
        %v1955 = vpop.f32.mrb[0].mxu0
        %v1956 = vadd.f32 %v1025, %v1955
        %v1957 = vpop.f32.mrb[0].mxu0
        %v1958 = vadd.f32 %v1025, %v1957
        %1959 = vmatprep.mubr.f32.mxu0 0.0
        %1960 = vmatmul.mubr.f32.gmra.mrb[0].mxu0 %v1064
        %v1961 = vpop.f32.mrb[0].mxu0
        %v1962 = vadd.f32 %v1030, %v1961
        %v1963 = vpop.f32.mrb[0].mxu0
        %v1964 = vadd.f32 %v1030, %v1963
        %1965 = vmatprep.mubr.f32.mxu0 0.0
        %1966 = vmatmul.mubr.f32.gmra.mrb[0].mxu0 %v1067
        %v1967 = vpop.f32.mrb[0].mxu0
        %v1968 = vadd.f32 %v1035, %v1967
        %v1969 = vpop.f32.mrb[0].mxu0
        %v1970 = vadd.f32 %v1035, %v1969
        %1971 = vmatprep.mubr.f32.mxu0 0.0
        %1972 = vmatmul.mubr.f32.gmra.mrb[0].mxu0 %v1070
        %v1973 = vpop.f32.mrb[0].mxu0
        %v1974 = vadd.f32 %v1040, %v1973
        %v1975 = vpop.f32.mrb[0].mxu0
        %v1976 = vadd.f32 %v1040, %v1975
        %1977 = vmatprep.mubr.f32.mxu0 0.0
        %1978 = vmatmul.mubr.f32.gmra.mrb[0].mxu0 %v1073
        %v1979 = vpop.f32.mrb[0].mxu0
        %v1980 = vadd.f32 %v1045, %v1979
        %v1981 = vpop.f32.mrb[0].mxu0
        %v1982 = vadd.f32 %v1045, %v1981
        %1983 = vmatprep.mubr.f32.mxu0 0.0
        %1984 = vmatmul.mubr.f32.gmra.mrb[0].mxu0 %v1076
        %v1985 = vpop.f32.mrb[0].mxu0
        %v1986 = vadd.f32 %v1050, %v1985
        %v1987 = vpop.f32.mrb[0].mxu0
        %v1988 = vadd.f32 %v1050, %v1987
        %1989 = vmatprep.mubr.f32.mxu0 0.0
        %1990 = vmatmul.mubr.f32.gmra.mrb[0].mxu0 %v1079
        %v1991 = vpop.f32.mrb[0].mxu0
        %v1992 = vadd.f32 %v1055, %v1991
        %v1993 = vpop.f32.mrb[0].mxu0
        %v1994 = vadd.f32 %v1055, %v1993
        %1995 = vdwg.mxu0
        %v1996 = vxor.u32 %v1950, 2147483648
        %v1997 = vxor.u32 %v1952, 2147483648
        %v1998 = vxor.u32 %v1956, 2147483648
        %v1999 = vxor.u32 %v1958, 2147483648
        %v2000 = vxor.u32 %v1962, 2147483648
        %v2001 = vxor.u32 %v1964, 2147483648
        %v2002 = vxor.u32 %v1968, 2147483648
        %v2003 = vxor.u32 %v1970, 2147483648
        %v2004 = vxor.u32 %v1974, 2147483648
        %v2005 = vxor.u32 %v1976, 2147483648
        %v2006 = vxor.u32 %v1980, 2147483648
        %v2007 = vxor.u32 %v1982, 2147483648
        %v2008 = vxor.u32 %v1986, 2147483648
        %v2009 = vxor.u32 %v1988, 2147483648
        %v2010 = vxor.u32 %v1992, 2147483648
        %v2011 = vxor.u32 %v1994, 2147483648
        %v2012 = vmul.f32 %v1996, 1.442695
        %v2013 = vpow.pop %v2012
        %v2014 = vmul.f32 %v1997, 1.442695
        %v2015 = vpow.pop %v2014
        %v2016 = vmul.f32 %v1998, 1.442695
        %v2017 = vpow.pop %v2016
        %v2018 = vmul.f32 %v1999, 1.442695
        %v2019 = vpow.pop %v2018
        %v2020 = vmul.f32 %v2000, 1.442695
        %v2021 = vpow.pop %v2020
        %v2022 = vmul.f32 %v2001, 1.442695
        %v2023 = vpow.pop %v2022
        %v2024 = vmul.f32 %v2002, 1.442695
        %v2025 = vpow.pop %v2024
        %v2026 = vmul.f32 %v2003, 1.442695
        %v2027 = vpow.pop %v2026
        %v2028 = vmul.f32 %v2004, 1.442695
        %v2029 = vpow.pop %v2028
        %v2030 = vmul.f32 %v2005, 1.442695
        %v2031 = vpow.pop %v2030
        %v2032 = vmul.f32 %v2006, 1.442695
        %v2033 = vpow.pop %v2032
        %v2034 = vmul.f32 %v2007, 1.442695
        %v2035 = vpow.pop %v2034
        %v2036 = vmul.f32 %v2008, 1.442695
        %v2037 = vpow.pop %v2036
        %v2038 = vmul.f32 %v2009, 1.442695
        %v2039 = vpow.pop %v2038
        %v2040 = vmul.f32 %v2010, 1.442695
        %v2041 = vpow.pop %v2040
        %v2042 = vmul.f32 %v2011, 1.442695
        %v2043 = vpow.pop %v2042
        %v2044 = vadd.f32 %v2013, 1.0
        %v2045 = vadd.f32 %v2015, 1.0
        %v2046 = vadd.f32 %v2017, 1.0
        %v2047 = vadd.f32 %v2019, 1.0
        %v2048 = vadd.f32 %v2021, 1.0
        %v2049 = vadd.f32 %v2023, 1.0
        %v2050 = vadd.f32 %v2025, 1.0
        %v2051 = vadd.f32 %v2027, 1.0
        %v2052 = vadd.f32 %v2029, 1.0
        %v2053 = vadd.f32 %v2031, 1.0
        %v2054 = vadd.f32 %v2033, 1.0
        %v2055 = vadd.f32 %v2035, 1.0
        %v2056 = vadd.f32 %v2037, 1.0
        %v2057 = vadd.f32 %v2039, 1.0
        %v2058 = vadd.f32 %v2041, 1.0
        %v2059 = vadd.f32 %v2043, 1.0
        %v2060 = vrcp.pop %v2044
        %v2061 = vmul.f32 1.0, %v2060
        %v2062 = vrcp.pop %v2045
        %v2063 = vmul.f32 1.0, %v2062
        %v2064 = vrcp.pop %v2046
        %v2065 = vmul.f32 1.0, %v2064
        %v2066 = vrcp.pop %v2047
        %v2067 = vmul.f32 1.0, %v2066
        %v2068 = vrcp.pop %v2048
        %v2069 = vmul.f32 1.0, %v2068
        %v2070 = vrcp.pop %v2049
        %v2071 = vmul.f32 1.0, %v2070
        %v2072 = vrcp.pop %v2050
        %v2073 = vmul.f32 1.0, %v2072
        %v2074 = vrcp.pop %v2051
        %v2075 = vmul.f32 1.0, %v2074
        %v2076 = vrcp.pop %v2052
        %v2077 = vmul.f32 1.0, %v2076
        %v2078 = vrcp.pop %v2053
        %v2079 = vmul.f32 1.0, %v2078
        %v2080 = vrcp.pop %v2054
        %v2081 = vmul.f32 1.0, %v2080
        %v2082 = vrcp.pop %v2055
        %v2083 = vmul.f32 1.0, %v2082
        %v2084 = vrcp.pop %v2056
        %v2085 = vmul.f32 1.0, %v2084
        %v2086 = vrcp.pop %v2057
        %v2087 = vmul.f32 1.0, %v2086
        %v2088 = vrcp.pop %v2058
        %v2089 = vmul.f32 1.0, %v2088
        %v2090 = vrcp.pop %v2059
        %v2091 = vmul.f32 1.0, %v2090
        %v2092 = vmul.f32 %v1372, %v2061
        %v2093 = vmul.f32 %v1373, %v2063
        %v2094 = vmul.f32 %v1374, %v2065
        %v2095 = vmul.f32 %v1375, %v2067
        %v2096 = vmul.f32 %v1376, %v2069
        %v2097 = vmul.f32 %v1377, %v2071
        %v2098 = vmul.f32 %v1378, %v2073
        %v2099 = vmul.f32 %v1379, %v2075
        %v2100 = vmul.f32 %v1380, %v2077
        %v2101 = vmul.f32 %v1381, %v2079
        %v2102 = vmul.f32 %v1382, %v2081
        %v2103 = vmul.f32 %v1383, %v2083
        %v2104 = vmul.f32 %v1384, %v2085
        %v2105 = vmul.f32 %v1385, %v2087
        %v2106 = vmul.f32 %v1386, %v2089
        %v2107 = vmul.f32 %v1387, %v2091
        %v2108 = vadd.f32 %v1356, %v2092
        %v2109 = vadd.f32 %v1357, %v2093
        %v2110 = vadd.f32 %v1358, %v2094
        %v2111 = vadd.f32 %v1359, %v2095
        %v2112 = vadd.f32 %v1360, %v2096
        %v2113 = vadd.f32 %v1361, %v2097
        %v2114 = vadd.f32 %v1362, %v2098
        %v2115 = vadd.f32 %v1363, %v2099
        %v2116 = vadd.f32 %v1364, %v2100
        %v2117 = vadd.f32 %v1365, %v2101
        %v2118 = vadd.f32 %v1366, %v2102
        %v2119 = vadd.f32 %v1367, %v2103
        %v2120 = vadd.f32 %v1368, %v2104
        %v2121 = vadd.f32 %v1369, %v2105
        %v2122 = vadd.f32 %v1370, %v2106
        %v2123 = vadd.f32 %v1371, %v2107
        %s2124 = scalar_lea.vmem %s311, 128 [#allocation7]
        %2125 = vst [vmem:[%s2124] sm:$0xff] %v2108
        %2126 = vst [vmem:[%s2124 + $0x8] sm:$0xff] %v2109
        %2127 = vst [vmem:[%s2124 + $0x10] sm:$0xff] %v2110
        %2128 = vst [vmem:[%s2124 + $0x18] sm:$0xff] %v2111
        %2129 = vst [vmem:[%s2124 + $0x20] sm:$0xff] %v2112
        %2130 = vst [vmem:[%s2124 + $0x28] sm:$0xff] %v2113
        %2131 = vst [vmem:[%s2124 + $0x30] sm:$0xff] %v2114
        %2132 = vst [vmem:[%s2124 + $0x38] sm:$0xff] %v2115
        %2133 = vst [vmem:[%s2124 + $0x40] sm:$0xff] %v2116
        %2134 = vst [vmem:[%s2124 + $0x48] sm:$0xff] %v2117
        %2135 = vst [vmem:[%s2124 + $0x50] sm:$0xff] %v2118
        %2136 = vst [vmem:[%s2124 + $0x58] sm:$0xff] %v2119
        %2137 = vst [vmem:[%s2124 + $0x60] sm:$0xff] %v2120
        %2138 = vst [vmem:[%s2124 + $0x68] sm:$0xff] %v2121
        %2139 = vst [vmem:[%s2124 + $0x70] sm:$0xff] %v2122
        %2140 = vst [vmem:[%s2124 + $0x78] sm:$0xff] %v2123
        %s2141 = sand.u32 %s170, 1
        %s2142 = scalar_lea.sflag [#allocation4], %s2141
        %s2143 = sand.u32 %s170, 1
        %s2144 = smul.addr %s2143, 256
        %s2145 = scalar_lea.vmem [#allocation7], %s2144
        // Predicated region
        $region53: #{tpu_custom_call.1} parent=43 // pred_check
          %p2146 = pneg %p180
        $region54: #{tpu_custom_call.1} parent=43 // pred_check_branch
          %2148 = sbr.rel (%p2146) target = $region56
        $region55: #{tpu_custom_call.1} parent=43 // pred_region
          %s2149 = smul.u32 2, %s26
          %s2151 = ssub.s32 4096, 4096
          %2152 = vsyncadd %s2142, %s2151
          %s2153 = smul.addr %s2149, 16
          %s2154 = smul.addr %s2153, 128
          %s2155 = scalar_lea.hbm %s6, %s2154
          %s2156 = sshll.u32 %s2145, 4
          %s2157 = int_to_ptr.vmem [resolvable:$true] %s2156
          %2162 = dma.vmem_to_hbm [thread:$0]  %s2157, 4096, %s2155, %s2142, 256, 256, 16
        $region56: #{tpu_custom_call.1} parent=43 // pred_fallthru
          _
      $region44: #{tpu_custom_call.1} parent=5 // pred_fallthru
        _
      %p2163 = scmp.le.s32.totalorder 2, %s21
      // Predicated region
      $region57: #{tpu_custom_call.1} parent=5 // pred_check
        %p2164 = pneg %p2163
      $region58: #{tpu_custom_call.1} parent=5 // pred_check_branch
        %2166 = sbr.rel (%p2164) target = $region60
      $region59: #{tpu_custom_call.1} parent=5 // pred_region
        %s2167 = ssub.s32 %s21, 2
        // Predicated region
        $region61: #{tpu_custom_call.1} parent=59 // pred_check
          %p2168 = pneg %p186
        $region62: #{tpu_custom_call.1} parent=59 // pred_check_branch
          %2170 = sbr.rel (%p2168) target = $region64
        $region63: #{tpu_custom_call.1} parent=59 // pred_region
          %s2171 = sand.u32 %s171, 1
          %s2172 = scalar_lea.sflag [#allocation4], %s2171
          %s2173 = sand.u32 %s171, 1
          %s2174 = smul.addr %s2173, 256
          %s2175 = scalar_lea.vmem [#allocation7], %s2174
          %2176 = dma.done %s2172, 4096
        $region64: #{tpu_custom_call.1} parent=59 // pred_fallthru
          _
      $region60: #{tpu_custom_call.1} parent=5 // pred_fallthru
        _
    $region6: #{tpu_custom_call.1} parent=1 // loop_footer
      %s25 = sadd.s32 1, %s21
    $region7: #{tpu_custom_call.1} parent=1 // loop_footer_branch
      %20 = sbr.rel target = $region3
    $region8: #{tpu_custom_call.1} parent=1 // loop_exit
      _
    %2177 = vsyncpa [#allocation3], 1
    %s2178 = scalar_lea.sflag [#allocation3], 1
    %2179 = vsyncpa %s2178, 1
    %2180 = vsyncpa [#allocation6], 1
    %s2181 = scalar_lea.sflag [#allocation6], 1
    %2182 = vsyncpa %s2181, 1
    %2183 = vsyncpa [#allocation4], 1
    %s2184 = scalar_lea.sflag [#allocation4], 1
    %2185 = vsyncpa %s2184, 1

</llo_original>
